<compile_context>
chip_gen: v7x
topology: tpu7x:2x2x1
jax: 0.10.0
libtpu: 0.0.40
codegen_flags: <defaults>
</compile_context>

<pallas_src>
import jax
import jax.numpy as jnp
from jax import lax
from jax.experimental import pallas as pl
from jax.experimental.pallas import tpu as pltpu


def fused_lstm_regressor_kernel(x_ref, wih0_ref, whh0_ref, b0_ref,
                                w1cat_ref, b1_ref, fcw_ref, fcb_ref, out_ref):
    """Fused 2-layer LSTM + Linear(hidden, 1) forward for one 8-row batch tile.

    x_ref    : (T, Bt, D)   t-major input tile (Bt = 8 sublane-filled batch rows)
    wih0_ref : (D, 4H)      layer-0 weight_ih, pre-transposed
    whh0_ref : (H, 4H)      layer-0 weight_hh, pre-transposed
    b0_ref   : (1, 4H)      layer-0 bias_ih + bias_hh
    w1cat_ref: (2H, 4H)     layer-1 [weight_ih; weight_hh] stacked, pre-transposed
    b1_ref   : (1, 4H)      layer-1 bias_ih + bias_hh
    fcw_ref  : (1, H)       fc weight as a row vector
    fcb_ref  : (1, 1)       fc bias
    out_ref  : (Bt, 1)      regression output tile
    Gate order matches PyTorch: i, f, g, o.
    """
    T, Bt, D = x_ref.shape
    H = whh0_ref.shape[0]

    # Hoist loop-invariant weight loads out of the time loop.
    whh0 = whh0_ref[...]
    w1cat = w1cat_ref[...]
    b1 = b1_ref[...]

    # Hoist the layer-0 input projection off the serial recurrence:
    # one (T*Bt, D) @ (D, 4H) MXU call, bias folded in.  t-major layout keeps each
    # timestep a contiguous static sublane slice of gx.
    x_flat = x_ref[...].astype(jnp.float32).reshape(T * Bt, D)
    gx = jnp.dot(x_flat, wih0_ref[...],
                 preferred_element_type=jnp.float32) + b0_ref[...]      # (T*Bt, 4H)

    # Lane mask: 0.5 on i/f/o lanes, 1.0 on g lanes -> sigmoid via a single tanh pass.
    lane = lax.broadcasted_iota(jnp.int32, (1, 4 * H), 1)
    pre_scale = jnp.where((lane >= 2 * H) & (lane < 3 * H), 1.0, 0.5).astype(jnp.float32)

    def lstm_cell(gates, c_prev):
        # One EUP pass over the full 4H-wide gate vector; sigmoid recovered on VPU.
        t_act = jnp.tanh(gates * pre_scale)
        i = 0.5 * t_act[:, 0 * H:1 * H] + 0.5
        f = 0.5 * t_act[:, 1 * H:2 * H] + 0.5
        g = t_act[:, 2 * H:3 * H]
        o = 0.5 * t_act[:, 3 * H:4 * H] + 0.5
        c_new = f * c_prev + i * g
        h_new = o * jnp.tanh(c_new)
        return h_new, c_new

    zeros = jnp.zeros((Bt, H), jnp.float32)
    h0, c0 = zeros, zeros
    h1, c1 = zeros, zeros

    # Short static trip-count -> fully unrolled serial recurrence; state stays in vregs.
    for t in range(T):
        # Layer 0: only the h @ W_hh matmul remains on the recurrent path.
        g0 = gx[t * Bt:(t + 1) * Bt, :] + jnp.dot(h0, whh0,
                                                  preferred_element_type=jnp.float32)
        h0, c0 = lstm_cell(g0, c0)
        # Layer 1: single combined matmul over [h0 | h1] against the stacked weight.
        hcat = jnp.concatenate([h0, h1], axis=-1)                       # (Bt, 2H)
        g1 = jnp.dot(hcat, w1cat, preferred_element_type=jnp.float32) + b1
        h1, c1 = lstm_cell(g1, c1)

    # FC head on the final hidden state only: VPU broadcast-mul + lane reduce (no MXU).
    out_ref[...] = (jnp.sum(h1 * fcw_ref[...], axis=-1, keepdims=True)
                    + fcb_ref[...]).astype(out_ref.dtype)


@jax.jit
def lstm_regressor_forward(x_btd, params):
    """x_btd: (B, T, D) batch-first, as in the PyTorch module. Returns (B, 1)."""
    # TODO(synk): inter-layer dropout (p=0.2) is a training-only op; this matches eval() mode.
    l0, l1 = params["layers"]
    B, T, D = x_btd.shape
    H = l0["w_hh_t"].shape[0]

    BT = 8                                   # fill all 8 sublanes per vreg
    B_pad = ((B + BT - 1) // BT) * BT
    nb = B_pad // BT

    # t-major + batch padding (done once in HBM by XLA, outside the kernel).
    x_tb = jnp.transpose(x_btd, (1, 0, 2))                               # (T, B, D)
    x_tb = jnp.pad(x_tb, ((0, 0), (0, B_pad - B), (0, 0)))               # (T, B_pad, D)

    # Pre-stack layer-1 weights so the recurrence does one matmul per step.
    w1_cat = jnp.concatenate([l1["w_ih_t"], l1["w_hh_t"]], axis=0)       # (2H, 4H)
    fc_w_row = params["fc_w_t"].T                                        # (1, H)

    out = pl.pallas_call(
        fused_lstm_regressor_kernel,
        out_shape=jax.ShapeDtypeStruct((B_pad, 1), jnp.float32),
        grid=(nb,),
        in_specs=[
            pl.BlockSpec((T, BT, D), lambda b: (0, b, 0)),
            pl.BlockSpec((D, 4 * H), lambda b: (0, 0)),
            pl.BlockSpec((H, 4 * H), lambda b: (0, 0)),
            pl.BlockSpec((1, 4 * H), lambda b: (0, 0)),
            pl.BlockSpec((2 * H, 4 * H), lambda b: (0, 0)),
            pl.BlockSpec((1, 4 * H), lambda b: (0, 0)),
            pl.BlockSpec((1, H), lambda b: (0, 0)),
            pl.BlockSpec((1, 1), lambda b: (0, 0)),
        ],
        out_specs=pl.BlockSpec((BT, 1), lambda b: (b, 0)),
        compiler_params=pltpu.CompilerParams(
            dimension_semantics=("parallel",)),      # batch tiles shard across v7x's 2 TCs
    )(x_tb, l0["w_ih_t"], l0["w_hh_t"], l0["b"],
      w1_cat, l1["b"], fc_w_row, params["fc_b"])
    return out[:B]


def init_params(key, input_size, hidden_size, num_layers):
    """Deterministic init matching PyTorch LSTM/Linear shapes (uniform +/- 1/sqrt(H))."""
    params = {"layers": []}
    k = 1.0 / jnp.sqrt(jnp.float32(hidden_size))
    keys = jax.random.split(key, num_layers * 4 + 2)
    ki = 0
    for layer in range(num_layers):
        d_in = input_size if layer == 0 else hidden_size
        w_ih = jax.random.uniform(keys[ki], (4 * hidden_size, d_in), jnp.float32, -k, k); ki += 1
        w_hh = jax.random.uniform(keys[ki], (4 * hidden_size, hidden_size), jnp.float32, -k, k); ki += 1
        b_ih = jax.random.uniform(keys[ki], (4 * hidden_size,), jnp.float32, -k, k); ki += 1
        b_hh = jax.random.uniform(keys[ki], (4 * hidden_size,), jnp.float32, -k, k); ki += 1
        params["layers"].append({
            # store pre-transposed for the kernel's (x @ W) convention
            "w_ih_t": w_ih.T,                       # (D_in, 4H)
            "w_hh_t": w_hh.T,                       # (H, 4H)
            "b": (b_ih + b_hh)[None, :],            # (1, 4H)
        })
    w_fc = jax.random.uniform(keys[ki], (1, hidden_size), jnp.float32, -k, k); ki += 1
    b_fc = jax.random.uniform(keys[ki], (1,), jnp.float32, -k, k); ki += 1
    params["fc_w_t"] = w_fc.T                       # (H, 1)
    params["fc_b"] = b_fc[None, :]                  # (1, 1)
    return params


def reference_forward(x_btd, params):
    """Pure-JAX reference (same math as torch eval-mode forward) for validation."""
    B, T, _ = x_btd.shape
    h_seq = x_btd
    for lp in params["layers"]:
        H = lp["w_hh_t"].shape[0]
        h_t = jnp.zeros((B, H), jnp.float32)
        c_t = jnp.zeros((B, H), jnp.float32)
        outs = []
        for t in range(T):
            gates = h_seq[:, t, :] @ lp["w_ih_t"] + h_t @ lp["w_hh_t"] + lp["b"]
            i = jax.nn.sigmoid(gates[:, 0 * H:1 * H])
            f = jax.nn.sigmoid(gates[:, 1 * H:2 * H])
            g = jnp.tanh(gates[:, 2 * H:3 * H])
            o = jax.nn.sigmoid(gates[:, 3 * H:4 * H])
            c_t = f * c_t + i * g
            h_t = o * jnp.tanh(c_t)
            outs.append(h_t)
        h_seq = jnp.stack(outs, axis=1)            # (B, T, H)
    return h_seq[:, -1, :] @ params["fc_w_t"] + params["fc_b"]


if __name__ == "__main__":
    B, T, D, H, L = 2, 8, 4, 32, 2
    key = jax.random.PRNGKey(0)
    kx, kp = jax.random.split(key)
    x = jax.random.normal(kx, (B, T, D), dtype=jnp.float32)
    params = init_params(kp, input_size=D, hidden_size=H, num_layers=L)

    out = lstm_regressor_forward(x, params)
    out = jax.block_until_ready(out)
    assert out.shape == (B, 1), out.shape

    ref = reference_forward(x, params)
    assert jnp.allclose(out, ref, atol=1e-4, rtol=1e-4), (out, ref)
    print("KERNEL_OK")
</pallas_src>

<mosaic_0001>
module attributes {stable_mosaic.version = 11 : i64} {
  func.func @fused_lstm_regressor_kernel(%arg0: i32, %arg1: memref<8x8x4xf32, #tpu.memory_space<vmem>>, %arg2: memref<4x128xf32, #tpu.memory_space<vmem>>, %arg3: memref<32x128xf32, #tpu.memory_space<vmem>>, %arg4: memref<1x128xf32, #tpu.memory_space<vmem>>, %arg5: memref<64x128xf32, #tpu.memory_space<vmem>>, %arg6: memref<1x128xf32, #tpu.memory_space<vmem>>, %arg7: memref<1x32xf32, #tpu.memory_space<vmem>>, %arg8: memref<1x1xf32, #tpu.memory_space<vmem>>, %arg9: memref<8x1xf32, #tpu.memory_space<vmem>>) attributes {dimension_semantics = [#tpu.dimension_semantics<parallel>], iteration_bounds = array<i64: 1>, scalar_prefetch = 0 : i64, scratch_operands = 0 : i64, tpu.core_type = #tpu.core_type<tc>, window_params = [{transform_indices = @transform_0, window_bounds = array<i64: 8, 8, 4>}, {pipeline_mode = #tpu.pipeline_mode<synchronous>, transform_indices = @transform_1, window_bounds = array<i64: 4, 128>}, {pipeline_mode = #tpu.pipeline_mode<synchronous>, transform_indices = @transform_2, window_bounds = array<i64: 32, 128>}, {pipeline_mode = #tpu.pipeline_mode<synchronous>, transform_indices = @transform_3, window_bounds = array<i64: 1, 128>}, {pipeline_mode = #tpu.pipeline_mode<synchronous>, transform_indices = @transform_4, window_bounds = array<i64: 64, 128>}, {pipeline_mode = #tpu.pipeline_mode<synchronous>, transform_indices = @transform_5, window_bounds = array<i64: 1, 128>}, {pipeline_mode = #tpu.pipeline_mode<synchronous>, transform_indices = @transform_6, window_bounds = array<i64: 1, 32>}, {pipeline_mode = #tpu.pipeline_mode<synchronous>, transform_indices = @transform_7, window_bounds = array<i64: 1, 1>}, {transform_indices = @transform_8, window_bounds = array<i64: 8, 1>}]} {
    %c0 = arith.constant 0 : index
    %c0_0 = arith.constant 0 : index
    %0 = vector.load %arg3[%c0, %c0_0] : memref<32x128xf32, #tpu.memory_space<vmem>>, vector<32x128xf32>
    %c0_1 = arith.constant 0 : index
    %c0_2 = arith.constant 0 : index
    %1 = vector.load %arg5[%c0_1, %c0_2] : memref<64x128xf32, #tpu.memory_space<vmem>>, vector<64x128xf32>
    %c0_3 = arith.constant 0 : index
    %c0_4 = arith.constant 0 : index
    %2 = vector.load %arg6[%c0_3, %c0_4] : memref<1x128xf32, #tpu.memory_space<vmem>>, vector<1x128xf32>
    %c0_5 = arith.constant 0 : index
    %c0_6 = arith.constant 0 : index
    %c0_7 = arith.constant 0 : index
    %3 = vector.load %arg1[%c0_5, %c0_6, %c0_7] : memref<8x8x4xf32, #tpu.memory_space<vmem>>, vector<8x8x4xf32>
    %4 = vector.shape_cast %3 : vector<8x8x4xf32> to vector<64x4xf32>
    %c0_8 = arith.constant 0 : index
    %c0_9 = arith.constant 0 : index
    %5 = vector.load %arg2[%c0_8, %c0_9] : memref<4x128xf32, #tpu.memory_space<vmem>>, vector<4x128xf32>
    %cst = arith.constant dense<0.000000e+00> : vector<64x128xf32>
    %6 = tpu.matmul %4, %5, %cst {dimension_numbers = #tpu.dot_dimension_numbers<[1], [0], [0], [1], [0, 0, 1, 1], [], []>} : vector<64x4xf32>, vector<4x128xf32>, vector<64x128xf32> -> vector<64x128xf32>
    %c0_10 = arith.constant 0 : index
    %c0_11 = arith.constant 0 : index
    %7 = vector.load %arg4[%c0_10, %c0_11] : memref<1x128xf32, #tpu.memory_space<vmem>>, vector<1x128xf32>
    %8 = vector.broadcast %7 : vector<1x128xf32> to vector<64x128xf32>
    %9 = arith.addf %6, %8 : vector<64x128xf32>
    %10 = tpu.iota {dimensions = array<i32: 1>} : vector<1x128xi32>
    %c64_i32 = arith.constant 64 : i32
    %11 = vector.broadcast %c64_i32 : i32 to vector<1x128xi32>
    %12 = arith.cmpi sge, %10, %11 : vector<1x128xi32>
    %c96_i32 = arith.constant 96 : i32
    %13 = vector.broadcast %c96_i32 : i32 to vector<1x128xi32>
    %14 = arith.cmpi slt, %10, %13 : vector<1x128xi32>
    %15 = arith.andi %12, %14 : vector<1x128xi1>
    %cst_12 = arith.constant 1.000000e+00 : f32
    %cst_13 = arith.constant 5.000000e-01 : f32
    %16 = vector.broadcast %cst_12 : f32 to vector<1x128xf32>
    %17 = vector.broadcast %cst_13 : f32 to vector<1x128xf32>
    %18 = arith.select %15, %16, %17 : vector<1x128xi1>, vector<1x128xf32>
    %cst_14 = arith.constant 0.000000e+00 : f32
    %19 = vector.broadcast %cst_14 : f32 to vector<8x32xf32>
    %20 = vector.extract_strided_slice %9 {offsets = [0, 0], sizes = [8, 128], strides = [1, 1]} : vector<64x128xf32> to vector<8x128xf32>
    %cst_15 = arith.constant dense<0.000000e+00> : vector<8x128xf32>
    %21 = tpu.matmul %19, %0, %cst_15 {dimension_numbers = #tpu.dot_dimension_numbers<[1], [0], [0], [1], [0, 0, 1, 1], [], []>} : vector<8x32xf32>, vector<32x128xf32>, vector<8x128xf32> -> vector<8x128xf32>
    %22 = arith.addf %20, %21 : vector<8x128xf32>
    %23 = vector.broadcast %18 : vector<1x128xf32> to vector<8x128xf32>
    %24 = arith.mulf %22, %23 : vector<8x128xf32>
    %25 = math.tanh %24 : vector<8x128xf32>
    %26 = vector.extract_strided_slice %25 {offsets = [0, 0], sizes = [8, 32], strides = [1, 1]} : vector<8x128xf32> to vector<8x32xf32>
    %cst_16 = arith.constant 5.000000e-01 : f32
    %27 = vector.broadcast %cst_16 : f32 to vector<8x32xf32>
    %28 = arith.mulf %27, %26 : vector<8x32xf32>
    %cst_17 = arith.constant 5.000000e-01 : f32
    %29 = vector.broadcast %cst_17 : f32 to vector<8x32xf32>
    %30 = arith.addf %28, %29 : vector<8x32xf32>
    %31 = vector.extract_strided_slice %25 {offsets = [0, 32], sizes = [8, 32], strides = [1, 1]} : vector<8x128xf32> to vector<8x32xf32>
    %cst_18 = arith.constant 5.000000e-01 : f32
    %32 = vector.broadcast %cst_18 : f32 to vector<8x32xf32>
    %33 = arith.mulf %32, %31 : vector<8x32xf32>
    %cst_19 = arith.constant 5.000000e-01 : f32
    %34 = vector.broadcast %cst_19 : f32 to vector<8x32xf32>
    %35 = arith.addf %33, %34 : vector<8x32xf32>
    %36 = vector.extract_strided_slice %25 {offsets = [0, 64], sizes = [8, 32], strides = [1, 1]} : vector<8x128xf32> to vector<8x32xf32>
    %37 = vector.extract_strided_slice %25 {offsets = [0, 96], sizes = [8, 32], strides = [1, 1]} : vector<8x128xf32> to vector<8x32xf32>
    %cst_20 = arith.constant 5.000000e-01 : f32
    %38 = vector.broadcast %cst_20 : f32 to vector<8x32xf32>
    %39 = arith.mulf %38, %37 : vector<8x32xf32>
    %cst_21 = arith.constant 5.000000e-01 : f32
    %40 = vector.broadcast %cst_21 : f32 to vector<8x32xf32>
    %41 = arith.addf %39, %40 : vector<8x32xf32>
    %42 = arith.mulf %35, %19 : vector<8x32xf32>
    %43 = arith.mulf %30, %36 : vector<8x32xf32>
    %44 = arith.addf %42, %43 : vector<8x32xf32>
    %45 = math.tanh %44 : vector<8x32xf32>
    %46 = arith.mulf %41, %45 : vector<8x32xf32>
    %47 = tpu.concatenate %46, %19 in 1 : vector<8x32xf32>, vector<8x32xf32> -> vector<8x64xf32>
    %cst_22 = arith.constant dense<0.000000e+00> : vector<8x128xf32>
    %48 = tpu.matmul %47, %1, %cst_22 {dimension_numbers = #tpu.dot_dimension_numbers<[1], [0], [0], [1], [0, 0, 1, 1], [], []>} : vector<8x64xf32>, vector<64x128xf32>, vector<8x128xf32> -> vector<8x128xf32>
    %49 = vector.broadcast %2 : vector<1x128xf32> to vector<8x128xf32>
    %50 = arith.addf %48, %49 : vector<8x128xf32>
    %51 = vector.broadcast %18 : vector<1x128xf32> to vector<8x128xf32>
    %52 = arith.mulf %50, %51 : vector<8x128xf32>
    %53 = math.tanh %52 : vector<8x128xf32>
    %54 = vector.extract_strided_slice %53 {offsets = [0, 0], sizes = [8, 32], strides = [1, 1]} : vector<8x128xf32> to vector<8x32xf32>
    %cst_23 = arith.constant 5.000000e-01 : f32
    %55 = vector.broadcast %cst_23 : f32 to vector<8x32xf32>
    %56 = arith.mulf %55, %54 : vector<8x32xf32>
    %cst_24 = arith.constant 5.000000e-01 : f32
    %57 = vector.broadcast %cst_24 : f32 to vector<8x32xf32>
    %58 = arith.addf %56, %57 : vector<8x32xf32>
    %59 = vector.extract_strided_slice %53 {offsets = [0, 32], sizes = [8, 32], strides = [1, 1]} : vector<8x128xf32> to vector<8x32xf32>
    %cst_25 = arith.constant 5.000000e-01 : f32
    %60 = vector.broadcast %cst_25 : f32 to vector<8x32xf32>
    %61 = arith.mulf %60, %59 : vector<8x32xf32>
    %cst_26 = arith.constant 5.000000e-01 : f32
    %62 = vector.broadcast %cst_26 : f32 to vector<8x32xf32>
    %63 = arith.addf %61, %62 : vector<8x32xf32>
    %64 = vector.extract_strided_slice %53 {offsets = [0, 64], sizes = [8, 32], strides = [1, 1]} : vector<8x128xf32> to vector<8x32xf32>
    %65 = vector.extract_strided_slice %53 {offsets = [0, 96], sizes = [8, 32], strides = [1, 1]} : vector<8x128xf32> to vector<8x32xf32>
    %cst_27 = arith.constant 5.000000e-01 : f32
    %66 = vector.broadcast %cst_27 : f32 to vector<8x32xf32>
    %67 = arith.mulf %66, %65 : vector<8x32xf32>
    %cst_28 = arith.constant 5.000000e-01 : f32
    %68 = vector.broadcast %cst_28 : f32 to vector<8x32xf32>
    %69 = arith.addf %67, %68 : vector<8x32xf32>
    %70 = arith.mulf %63, %19 : vector<8x32xf32>
    %71 = arith.mulf %58, %64 : vector<8x32xf32>
    %72 = arith.addf %70, %71 : vector<8x32xf32>
    %73 = math.tanh %72 : vector<8x32xf32>
    %74 = arith.mulf %69, %73 : vector<8x32xf32>
    %75 = vector.extract_strided_slice %9 {offsets = [8, 0], sizes = [8, 128], strides = [1, 1]} : vector<64x128xf32> to vector<8x128xf32>
    %cst_29 = arith.constant dense<0.000000e+00> : vector<8x128xf32>
    %76 = tpu.matmul %46, %0, %cst_29 {dimension_numbers = #tpu.dot_dimension_numbers<[1], [0], [0], [1], [0, 0, 1, 1], [], []>} : vector<8x32xf32>, vector<32x128xf32>, vector<8x128xf32> -> vector<8x128xf32>
    %77 = arith.addf %75, %76 : vector<8x128xf32>
    %78 = vector.broadcast %18 : vector<1x128xf32> to vector<8x128xf32>
    %79 = arith.mulf %77, %78 : vector<8x128xf32>
    %80 = math.tanh %79 : vector<8x128xf32>
    %81 = vector.extract_strided_slice %80 {offsets = [0, 0], sizes = [8, 32], strides = [1, 1]} : vector<8x128xf32> to vector<8x32xf32>
    %cst_30 = arith.constant 5.000000e-01 : f32
    %82 = vector.broadcast %cst_30 : f32 to vector<8x32xf32>
    %83 = arith.mulf %82, %81 : vector<8x32xf32>
    %cst_31 = arith.constant 5.000000e-01 : f32
    %84 = vector.broadcast %cst_31 : f32 to vector<8x32xf32>
    %85 = arith.addf %83, %84 : vector<8x32xf32>
    %86 = vector.extract_strided_slice %80 {offsets = [0, 32], sizes = [8, 32], strides = [1, 1]} : vector<8x128xf32> to vector<8x32xf32>
    %cst_32 = arith.constant 5.000000e-01 : f32
    %87 = vector.broadcast %cst_32 : f32 to vector<8x32xf32>
    %88 = arith.mulf %87, %86 : vector<8x32xf32>
    %cst_33 = arith.constant 5.000000e-01 : f32
    %89 = vector.broadcast %cst_33 : f32 to vector<8x32xf32>
    %90 = arith.addf %88, %89 : vector<8x32xf32>
    %91 = vector.extract_strided_slice %80 {offsets = [0, 64], sizes = [8, 32], strides = [1, 1]} : vector<8x128xf32> to vector<8x32xf32>
    %92 = vector.extract_strided_slice %80 {offsets = [0, 96], sizes = [8, 32], strides = [1, 1]} : vector<8x128xf32> to vector<8x32xf32>
    %cst_34 = arith.constant 5.000000e-01 : f32
    %93 = vector.broadcast %cst_34 : f32 to vector<8x32xf32>
    %94 = arith.mulf %93, %92 : vector<8x32xf32>
    %cst_35 = arith.constant 5.000000e-01 : f32
    %95 = vector.broadcast %cst_35 : f32 to vector<8x32xf32>
    %96 = arith.addf %94, %95 : vector<8x32xf32>
    %97 = arith.mulf %90, %44 : vector<8x32xf32>
    %98 = arith.mulf %85, %91 : vector<8x32xf32>
    %99 = arith.addf %97, %98 : vector<8x32xf32>
    %100 = math.tanh %99 : vector<8x32xf32>
    %101 = arith.mulf %96, %100 : vector<8x32xf32>
    %102 = tpu.concatenate %101, %74 in 1 : vector<8x32xf32>, vector<8x32xf32> -> vector<8x64xf32>
    %cst_36 = arith.constant dense<0.000000e+00> : vector<8x128xf32>
    %103 = tpu.matmul %102, %1, %cst_36 {dimension_numbers = #tpu.dot_dimension_numbers<[1], [0], [0], [1], [0, 0, 1, 1], [], []>} : vector<8x64xf32>, vector<64x128xf32>, vector<8x128xf32> -> vector<8x128xf32>
    %104 = vector.broadcast %2 : vector<1x128xf32> to vector<8x128xf32>
    %105 = arith.addf %103, %104 : vector<8x128xf32>
    %106 = vector.broadcast %18 : vector<1x128xf32> to vector<8x128xf32>
    %107 = arith.mulf %105, %106 : vector<8x128xf32>
    %108 = math.tanh %107 : vector<8x128xf32>
    %109 = vector.extract_strided_slice %108 {offsets = [0, 0], sizes = [8, 32], strides = [1, 1]} : vector<8x128xf32> to vector<8x32xf32>
    %cst_37 = arith.constant 5.000000e-01 : f32
    %110 = vector.broadcast %cst_37 : f32 to vector<8x32xf32>
    %111 = arith.mulf %110, %109 : vector<8x32xf32>
    %cst_38 = arith.constant 5.000000e-01 : f32
    %112 = vector.broadcast %cst_38 : f32 to vector<8x32xf32>
    %113 = arith.addf %111, %112 : vector<8x32xf32>
    %114 = vector.extract_strided_slice %108 {offsets = [0, 32], sizes = [8, 32], strides = [1, 1]} : vector<8x128xf32> to vector<8x32xf32>
    %cst_39 = arith.constant 5.000000e-01 : f32
    %115 = vector.broadcast %cst_39 : f32 to vector<8x32xf32>
    %116 = arith.mulf %115, %114 : vector<8x32xf32>
    %cst_40 = arith.constant 5.000000e-01 : f32
    %117 = vector.broadcast %cst_40 : f32 to vector<8x32xf32>
    %118 = arith.addf %116, %117 : vector<8x32xf32>
    %119 = vector.extract_strided_slice %108 {offsets = [0, 64], sizes = [8, 32], strides = [1, 1]} : vector<8x128xf32> to vector<8x32xf32>
    %120 = vector.extract_strided_slice %108 {offsets = [0, 96], sizes = [8, 32], strides = [1, 1]} : vector<8x128xf32> to vector<8x32xf32>
    %cst_41 = arith.constant 5.000000e-01 : f32
    %121 = vector.broadcast %cst_41 : f32 to vector<8x32xf32>
    %122 = arith.mulf %121, %120 : vector<8x32xf32>
    %cst_42 = arith.constant 5.000000e-01 : f32
    %123 = vector.broadcast %cst_42 : f32 to vector<8x32xf32>
    %124 = arith.addf %122, %123 : vector<8x32xf32>
    %125 = arith.mulf %118, %72 : vector<8x32xf32>
    %126 = arith.mulf %113, %119 : vector<8x32xf32>
    %127 = arith.addf %125, %126 : vector<8x32xf32>
    %128 = math.tanh %127 : vector<8x32xf32>
    %129 = arith.mulf %124, %128 : vector<8x32xf32>
    %130 = vector.extract_strided_slice %9 {offsets = [16, 0], sizes = [8, 128], strides = [1, 1]} : vector<64x128xf32> to vector<8x128xf32>
    %cst_43 = arith.constant dense<0.000000e+00> : vector<8x128xf32>
    %131 = tpu.matmul %101, %0, %cst_43 {dimension_numbers = #tpu.dot_dimension_numbers<[1], [0], [0], [1], [0, 0, 1, 1], [], []>} : vector<8x32xf32>, vector<32x128xf32>, vector<8x128xf32> -> vector<8x128xf32>
    %132 = arith.addf %130, %131 : vector<8x128xf32>
    %133 = vector.broadcast %18 : vector<1x128xf32> to vector<8x128xf32>
    %134 = arith.mulf %132, %133 : vector<8x128xf32>
    %135 = math.tanh %134 : vector<8x128xf32>
    %136 = vector.extract_strided_slice %135 {offsets = [0, 0], sizes = [8, 32], strides = [1, 1]} : vector<8x128xf32> to vector<8x32xf32>
    %cst_44 = arith.constant 5.000000e-01 : f32
    %137 = vector.broadcast %cst_44 : f32 to vector<8x32xf32>
    %138 = arith.mulf %137, %136 : vector<8x32xf32>
    %cst_45 = arith.constant 5.000000e-01 : f32
    %139 = vector.broadcast %cst_45 : f32 to vector<8x32xf32>
    %140 = arith.addf %138, %139 : vector<8x32xf32>
    %141 = vector.extract_strided_slice %135 {offsets = [0, 32], sizes = [8, 32], strides = [1, 1]} : vector<8x128xf32> to vector<8x32xf32>
    %cst_46 = arith.constant 5.000000e-01 : f32
    %142 = vector.broadcast %cst_46 : f32 to vector<8x32xf32>
    %143 = arith.mulf %142, %141 : vector<8x32xf32>
    %cst_47 = arith.constant 5.000000e-01 : f32
    %144 = vector.broadcast %cst_47 : f32 to vector<8x32xf32>
    %145 = arith.addf %143, %144 : vector<8x32xf32>
    %146 = vector.extract_strided_slice %135 {offsets = [0, 64], sizes = [8, 32], strides = [1, 1]} : vector<8x128xf32> to vector<8x32xf32>
    %147 = vector.extract_strided_slice %135 {offsets = [0, 96], sizes = [8, 32], strides = [1, 1]} : vector<8x128xf32> to vector<8x32xf32>
    %cst_48 = arith.constant 5.000000e-01 : f32
    %148 = vector.broadcast %cst_48 : f32 to vector<8x32xf32>
    %149 = arith.mulf %148, %147 : vector<8x32xf32>
    %cst_49 = arith.constant 5.000000e-01 : f32
    %150 = vector.broadcast %cst_49 : f32 to vector<8x32xf32>
    %151 = arith.addf %149, %150 : vector<8x32xf32>
    %152 = arith.mulf %145, %99 : vector<8x32xf32>
    %153 = arith.mulf %140, %146 : vector<8x32xf32>
    %154 = arith.addf %152, %153 : vector<8x32xf32>
    %155 = math.tanh %154 : vector<8x32xf32>
    %156 = arith.mulf %151, %155 : vector<8x32xf32>
    %157 = tpu.concatenate %156, %129 in 1 : vector<8x32xf32>, vector<8x32xf32> -> vector<8x64xf32>
    %cst_50 = arith.constant dense<0.000000e+00> : vector<8x128xf32>
    %158 = tpu.matmul %157, %1, %cst_50 {dimension_numbers = #tpu.dot_dimension_numbers<[1], [0], [0], [1], [0, 0, 1, 1], [], []>} : vector<8x64xf32>, vector<64x128xf32>, vector<8x128xf32> -> vector<8x128xf32>
    %159 = vector.broadcast %2 : vector<1x128xf32> to vector<8x128xf32>
    %160 = arith.addf %158, %159 : vector<8x128xf32>
    %161 = vector.broadcast %18 : vector<1x128xf32> to vector<8x128xf32>
    %162 = arith.mulf %160, %161 : vector<8x128xf32>
    %163 = math.tanh %162 : vector<8x128xf32>
    %164 = vector.extract_strided_slice %163 {offsets = [0, 0], sizes = [8, 32], strides = [1, 1]} : vector<8x128xf32> to vector<8x32xf32>
    %cst_51 = arith.constant 5.000000e-01 : f32
    %165 = vector.broadcast %cst_51 : f32 to vector<8x32xf32>
    %166 = arith.mulf %165, %164 : vector<8x32xf32>
    %cst_52 = arith.constant 5.000000e-01 : f32
    %167 = vector.broadcast %cst_52 : f32 to vector<8x32xf32>
    %168 = arith.addf %166, %167 : vector<8x32xf32>
    %169 = vector.extract_strided_slice %163 {offsets = [0, 32], sizes = [8, 32], strides = [1, 1]} : vector<8x128xf32> to vector<8x32xf32>
    %cst_53 = arith.constant 5.000000e-01 : f32
    %170 = vector.broadcast %cst_53 : f32 to vector<8x32xf32>
    %171 = arith.mulf %170, %169 : vector<8x32xf32>
    %cst_54 = arith.constant 5.000000e-01 : f32
    %172 = vector.broadcast %cst_54 : f32 to vector<8x32xf32>
    %173 = arith.addf %171, %172 : vector<8x32xf32>
    %174 = vector.extract_strided_slice %163 {offsets = [0, 64], sizes = [8, 32], strides = [1, 1]} : vector<8x128xf32> to vector<8x32xf32>
    %175 = vector.extract_strided_slice %163 {offsets = [0, 96], sizes = [8, 32], strides = [1, 1]} : vector<8x128xf32> to vector<8x32xf32>
    %cst_55 = arith.constant 5.000000e-01 : f32
    %176 = vector.broadcast %cst_55 : f32 to vector<8x32xf32>
    %177 = arith.mulf %176, %175 : vector<8x32xf32>
    %cst_56 = arith.constant 5.000000e-01 : f32
    %178 = vector.broadcast %cst_56 : f32 to vector<8x32xf32>
    %179 = arith.addf %177, %178 : vector<8x32xf32>
    %180 = arith.mulf %173, %127 : vector<8x32xf32>
    %181 = arith.mulf %168, %174 : vector<8x32xf32>
    %182 = arith.addf %180, %181 : vector<8x32xf32>
    %183 = math.tanh %182 : vector<8x32xf32>
    %184 = arith.mulf %179, %183 : vector<8x32xf32>
    %185 = vector.extract_strided_slice %9 {offsets = [24, 0], sizes = [8, 128], strides = [1, 1]} : vector<64x128xf32> to vector<8x128xf32>
    %cst_57 = arith.constant dense<0.000000e+00> : vector<8x128xf32>
    %186 = tpu.matmul %156, %0, %cst_57 {dimension_numbers = #tpu.dot_dimension_numbers<[1], [0], [0], [1], [0, 0, 1, 1], [], []>} : vector<8x32xf32>, vector<32x128xf32>, vector<8x128xf32> -> vector<8x128xf32>
    %187 = arith.addf %185, %186 : vector<8x128xf32>
    %188 = vector.broadcast %18 : vector<1x128xf32> to vector<8x128xf32>
    %189 = arith.mulf %187, %188 : vector<8x128xf32>
    %190 = math.tanh %189 : vector<8x128xf32>
    %191 = vector.extract_strided_slice %190 {offsets = [0, 0], sizes = [8, 32], strides = [1, 1]} : vector<8x128xf32> to vector<8x32xf32>
    %cst_58 = arith.constant 5.000000e-01 : f32
    %192 = vector.broadcast %cst_58 : f32 to vector<8x32xf32>
    %193 = arith.mulf %192, %191 : vector<8x32xf32>
    %cst_59 = arith.constant 5.000000e-01 : f32
    %194 = vector.broadcast %cst_59 : f32 to vector<8x32xf32>
    %195 = arith.addf %193, %194 : vector<8x32xf32>
    %196 = vector.extract_strided_slice %190 {offsets = [0, 32], sizes = [8, 32], strides = [1, 1]} : vector<8x128xf32> to vector<8x32xf32>
    %cst_60 = arith.constant 5.000000e-01 : f32
    %197 = vector.broadcast %cst_60 : f32 to vector<8x32xf32>
    %198 = arith.mulf %197, %196 : vector<8x32xf32>
    %cst_61 = arith.constant 5.000000e-01 : f32
    %199 = vector.broadcast %cst_61 : f32 to vector<8x32xf32>
    %200 = arith.addf %198, %199 : vector<8x32xf32>
    %201 = vector.extract_strided_slice %190 {offsets = [0, 64], sizes = [8, 32], strides = [1, 1]} : vector<8x128xf32> to vector<8x32xf32>
    %202 = vector.extract_strided_slice %190 {offsets = [0, 96], sizes = [8, 32], strides = [1, 1]} : vector<8x128xf32> to vector<8x32xf32>
    %cst_62 = arith.constant 5.000000e-01 : f32
    %203 = vector.broadcast %cst_62 : f32 to vector<8x32xf32>
    %204 = arith.mulf %203, %202 : vector<8x32xf32>
    %cst_63 = arith.constant 5.000000e-01 : f32
    %205 = vector.broadcast %cst_63 : f32 to vector<8x32xf32>
    %206 = arith.addf %204, %205 : vector<8x32xf32>
    %207 = arith.mulf %200, %154 : vector<8x32xf32>
    %208 = arith.mulf %195, %201 : vector<8x32xf32>
    %209 = arith.addf %207, %208 : vector<8x32xf32>
    %210 = math.tanh %209 : vector<8x32xf32>
    %211 = arith.mulf %206, %210 : vector<8x32xf32>
    %212 = tpu.concatenate %211, %184 in 1 : vector<8x32xf32>, vector<8x32xf32> -> vector<8x64xf32>
    %cst_64 = arith.constant dense<0.000000e+00> : vector<8x128xf32>
    %213 = tpu.matmul %212, %1, %cst_64 {dimension_numbers = #tpu.dot_dimension_numbers<[1], [0], [0], [1], [0, 0, 1, 1], [], []>} : vector<8x64xf32>, vector<64x128xf32>, vector<8x128xf32> -> vector<8x128xf32>
    %214 = vector.broadcast %2 : vector<1x128xf32> to vector<8x128xf32>
    %215 = arith.addf %213, %214 : vector<8x128xf32>
    %216 = vector.broadcast %18 : vector<1x128xf32> to vector<8x128xf32>
    %217 = arith.mulf %215, %216 : vector<8x128xf32>
    %218 = math.tanh %217 : vector<8x128xf32>
    %219 = vector.extract_strided_slice %218 {offsets = [0, 0], sizes = [8, 32], strides = [1, 1]} : vector<8x128xf32> to vector<8x32xf32>
    %cst_65 = arith.constant 5.000000e-01 : f32
    %220 = vector.broadcast %cst_65 : f32 to vector<8x32xf32>
    %221 = arith.mulf %220, %219 : vector<8x32xf32>
    %cst_66 = arith.constant 5.000000e-01 : f32
    %222 = vector.broadcast %cst_66 : f32 to vector<8x32xf32>
    %223 = arith.addf %221, %222 : vector<8x32xf32>
    %224 = vector.extract_strided_slice %218 {offsets = [0, 32], sizes = [8, 32], strides = [1, 1]} : vector<8x128xf32> to vector<8x32xf32>
    %cst_67 = arith.constant 5.000000e-01 : f32
    %225 = vector.broadcast %cst_67 : f32 to vector<8x32xf32>
    %226 = arith.mulf %225, %224 : vector<8x32xf32>
    %cst_68 = arith.constant 5.000000e-01 : f32
    %227 = vector.broadcast %cst_68 : f32 to vector<8x32xf32>
    %228 = arith.addf %226, %227 : vector<8x32xf32>
    %229 = vector.extract_strided_slice %218 {offsets = [0, 64], sizes = [8, 32], strides = [1, 1]} : vector<8x128xf32> to vector<8x32xf32>
    %230 = vector.extract_strided_slice %218 {offsets = [0, 96], sizes = [8, 32], strides = [1, 1]} : vector<8x128xf32> to vector<8x32xf32>
    %cst_69 = arith.constant 5.000000e-01 : f32
    %231 = vector.broadcast %cst_69 : f32 to vector<8x32xf32>
    %232 = arith.mulf %231, %230 : vector<8x32xf32>
    %cst_70 = arith.constant 5.000000e-01 : f32
    %233 = vector.broadcast %cst_70 : f32 to vector<8x32xf32>
    %234 = arith.addf %232, %233 : vector<8x32xf32>
    %235 = arith.mulf %228, %182 : vector<8x32xf32>
    %236 = arith.mulf %223, %229 : vector<8x32xf32>
    %237 = arith.addf %235, %236 : vector<8x32xf32>
    %238 = math.tanh %237 : vector<8x32xf32>
    %239 = arith.mulf %234, %238 : vector<8x32xf32>
    %240 = vector.extract_strided_slice %9 {offsets = [32, 0], sizes = [8, 128], strides = [1, 1]} : vector<64x128xf32> to vector<8x128xf32>
    %cst_71 = arith.constant dense<0.000000e+00> : vector<8x128xf32>
    %241 = tpu.matmul %211, %0, %cst_71 {dimension_numbers = #tpu.dot_dimension_numbers<[1], [0], [0], [1], [0, 0, 1, 1], [], []>} : vector<8x32xf32>, vector<32x128xf32>, vector<8x128xf32> -> vector<8x128xf32>
    %242 = arith.addf %240, %241 : vector<8x128xf32>
    %243 = vector.broadcast %18 : vector<1x128xf32> to vector<8x128xf32>
    %244 = arith.mulf %242, %243 : vector<8x128xf32>
    %245 = math.tanh %244 : vector<8x128xf32>
    %246 = vector.extract_strided_slice %245 {offsets = [0, 0], sizes = [8, 32], strides = [1, 1]} : vector<8x128xf32> to vector<8x32xf32>
    %cst_72 = arith.constant 5.000000e-01 : f32
    %247 = vector.broadcast %cst_72 : f32 to vector<8x32xf32>
    %248 = arith.mulf %247, %246 : vector<8x32xf32>
    %cst_73 = arith.constant 5.000000e-01 : f32
    %249 = vector.broadcast %cst_73 : f32 to vector<8x32xf32>
    %250 = arith.addf %248, %249 : vector<8x32xf32>
    %251 = vector.extract_strided_slice %245 {offsets = [0, 32], sizes = [8, 32], strides = [1, 1]} : vector<8x128xf32> to vector<8x32xf32>
    %cst_74 = arith.constant 5.000000e-01 : f32
    %252 = vector.broadcast %cst_74 : f32 to vector<8x32xf32>
    %253 = arith.mulf %252, %251 : vector<8x32xf32>
    %cst_75 = arith.constant 5.000000e-01 : f32
    %254 = vector.broadcast %cst_75 : f32 to vector<8x32xf32>
    %255 = arith.addf %253, %254 : vector<8x32xf32>
    %256 = vector.extract_strided_slice %245 {offsets = [0, 64], sizes = [8, 32], strides = [1, 1]} : vector<8x128xf32> to vector<8x32xf32>
    %257 = vector.extract_strided_slice %245 {offsets = [0, 96], sizes = [8, 32], strides = [1, 1]} : vector<8x128xf32> to vector<8x32xf32>
    %cst_76 = arith.constant 5.000000e-01 : f32
    %258 = vector.broadcast %cst_76 : f32 to vector<8x32xf32>
    %259 = arith.mulf %258, %257 : vector<8x32xf32>
    %cst_77 = arith.constant 5.000000e-01 : f32
    %260 = vector.broadcast %cst_77 : f32 to vector<8x32xf32>
    %261 = arith.addf %259, %260 : vector<8x32xf32>
    %262 = arith.mulf %255, %209 : vector<8x32xf32>
    %263 = arith.mulf %250, %256 : vector<8x32xf32>
    %264 = arith.addf %262, %263 : vector<8x32xf32>
    %265 = math.tanh %264 : vector<8x32xf32>
    %266 = arith.mulf %261, %265 : vector<8x32xf32>
    %267 = tpu.concatenate %266, %239 in 1 : vector<8x32xf32>, vector<8x32xf32> -> vector<8x64xf32>
    %cst_78 = arith.constant dense<0.000000e+00> : vector<8x128xf32>
    %268 = tpu.matmul %267, %1, %cst_78 {dimension_numbers = #tpu.dot_dimension_numbers<[1], [0], [0], [1], [0, 0, 1, 1], [], []>} : vector<8x64xf32>, vector<64x128xf32>, vector<8x128xf32> -> vector<8x128xf32>
    %269 = vector.broadcast %2 : vector<1x128xf32> to vector<8x128xf32>
    %270 = arith.addf %268, %269 : vector<8x128xf32>
    %271 = vector.broadcast %18 : vector<1x128xf32> to vector<8x128xf32>
    %272 = arith.mulf %270, %271 : vector<8x128xf32>
    %273 = math.tanh %272 : vector<8x128xf32>
    %274 = vector.extract_strided_slice %273 {offsets = [0, 0], sizes = [8, 32], strides = [1, 1]} : vector<8x128xf32> to vector<8x32xf32>
    %cst_79 = arith.constant 5.000000e-01 : f32
    %275 = vector.broadcast %cst_79 : f32 to vector<8x32xf32>
    %276 = arith.mulf %275, %274 : vector<8x32xf32>
    %cst_80 = arith.constant 5.000000e-01 : f32
    %277 = vector.broadcast %cst_80 : f32 to vector<8x32xf32>
    %278 = arith.addf %276, %277 : vector<8x32xf32>
    %279 = vector.extract_strided_slice %273 {offsets = [0, 32], sizes = [8, 32], strides = [1, 1]} : vector<8x128xf32> to vector<8x32xf32>
    %cst_81 = arith.constant 5.000000e-01 : f32
    %280 = vector.broadcast %cst_81 : f32 to vector<8x32xf32>
    %281 = arith.mulf %280, %279 : vector<8x32xf32>
    %cst_82 = arith.constant 5.000000e-01 : f32
    %282 = vector.broadcast %cst_82 : f32 to vector<8x32xf32>
    %283 = arith.addf %281, %282 : vector<8x32xf32>
    %284 = vector.extract_strided_slice %273 {offsets = [0, 64], sizes = [8, 32], strides = [1, 1]} : vector<8x128xf32> to vector<8x32xf32>
    %285 = vector.extract_strided_slice %273 {offsets = [0, 96], sizes = [8, 32], strides = [1, 1]} : vector<8x128xf32> to vector<8x32xf32>
    %cst_83 = arith.constant 5.000000e-01 : f32
    %286 = vector.broadcast %cst_83 : f32 to vector<8x32xf32>
    %287 = arith.mulf %286, %285 : vector<8x32xf32>
    %cst_84 = arith.constant 5.000000e-01 : f32
    %288 = vector.broadcast %cst_84 : f32 to vector<8x32xf32>
    %289 = arith.addf %287, %288 : vector<8x32xf32>
    %290 = arith.mulf %283, %237 : vector<8x32xf32>
    %291 = arith.mulf %278, %284 : vector<8x32xf32>
    %292 = arith.addf %290, %291 : vector<8x32xf32>
    %293 = math.tanh %292 : vector<8x32xf32>
    %294 = arith.mulf %289, %293 : vector<8x32xf32>
    %295 = vector.extract_strided_slice %9 {offsets = [40, 0], sizes = [8, 128], strides = [1, 1]} : vector<64x128xf32> to vector<8x128xf32>
    %cst_85 = arith.constant dense<0.000000e+00> : vector<8x128xf32>
    %296 = tpu.matmul %266, %0, %cst_85 {dimension_numbers = #tpu.dot_dimension_numbers<[1], [0], [0], [1], [0, 0, 1, 1], [], []>} : vector<8x32xf32>, vector<32x128xf32>, vector<8x128xf32> -> vector<8x128xf32>
    %297 = arith.addf %295, %296 : vector<8x128xf32>
    %298 = vector.broadcast %18 : vector<1x128xf32> to vector<8x128xf32>
    %299 = arith.mulf %297, %298 : vector<8x128xf32>
    %300 = math.tanh %299 : vector<8x128xf32>
    %301 = vector.extract_strided_slice %300 {offsets = [0, 0], sizes = [8, 32], strides = [1, 1]} : vector<8x128xf32> to vector<8x32xf32>
    %cst_86 = arith.constant 5.000000e-01 : f32
    %302 = vector.broadcast %cst_86 : f32 to vector<8x32xf32>
    %303 = arith.mulf %302, %301 : vector<8x32xf32>
    %cst_87 = arith.constant 5.000000e-01 : f32
    %304 = vector.broadcast %cst_87 : f32 to vector<8x32xf32>
    %305 = arith.addf %303, %304 : vector<8x32xf32>
    %306 = vector.extract_strided_slice %300 {offsets = [0, 32], sizes = [8, 32], strides = [1, 1]} : vector<8x128xf32> to vector<8x32xf32>
    %cst_88 = arith.constant 5.000000e-01 : f32
    %307 = vector.broadcast %cst_88 : f32 to vector<8x32xf32>
    %308 = arith.mulf %307, %306 : vector<8x32xf32>
    %cst_89 = arith.constant 5.000000e-01 : f32
    %309 = vector.broadcast %cst_89 : f32 to vector<8x32xf32>
    %310 = arith.addf %308, %309 : vector<8x32xf32>
    %311 = vector.extract_strided_slice %300 {offsets = [0, 64], sizes = [8, 32], strides = [1, 1]} : vector<8x128xf32> to vector<8x32xf32>
    %312 = vector.extract_strided_slice %300 {offsets = [0, 96], sizes = [8, 32], strides = [1, 1]} : vector<8x128xf32> to vector<8x32xf32>
    %cst_90 = arith.constant 5.000000e-01 : f32
    %313 = vector.broadcast %cst_90 : f32 to vector<8x32xf32>
    %314 = arith.mulf %313, %312 : vector<8x32xf32>
    %cst_91 = arith.constant 5.000000e-01 : f32
    %315 = vector.broadcast %cst_91 : f32 to vector<8x32xf32>
    %316 = arith.addf %314, %315 : vector<8x32xf32>
    %317 = arith.mulf %310, %264 : vector<8x32xf32>
    %318 = arith.mulf %305, %311 : vector<8x32xf32>
    %319 = arith.addf %317, %318 : vector<8x32xf32>
    %320 = math.tanh %319 : vector<8x32xf32>
    %321 = arith.mulf %316, %320 : vector<8x32xf32>
    %322 = tpu.concatenate %321, %294 in 1 : vector<8x32xf32>, vector<8x32xf32> -> vector<8x64xf32>
    %cst_92 = arith.constant dense<0.000000e+00> : vector<8x128xf32>
    %323 = tpu.matmul %322, %1, %cst_92 {dimension_numbers = #tpu.dot_dimension_numbers<[1], [0], [0], [1], [0, 0, 1, 1], [], []>} : vector<8x64xf32>, vector<64x128xf32>, vector<8x128xf32> -> vector<8x128xf32>
    %324 = vector.broadcast %2 : vector<1x128xf32> to vector<8x128xf32>
    %325 = arith.addf %323, %324 : vector<8x128xf32>
    %326 = vector.broadcast %18 : vector<1x128xf32> to vector<8x128xf32>
    %327 = arith.mulf %325, %326 : vector<8x128xf32>
    %328 = math.tanh %327 : vector<8x128xf32>
    %329 = vector.extract_strided_slice %328 {offsets = [0, 0], sizes = [8, 32], strides = [1, 1]} : vector<8x128xf32> to vector<8x32xf32>
    %cst_93 = arith.constant 5.000000e-01 : f32
    %330 = vector.broadcast %cst_93 : f32 to vector<8x32xf32>
    %331 = arith.mulf %330, %329 : vector<8x32xf32>
    %cst_94 = arith.constant 5.000000e-01 : f32
    %332 = vector.broadcast %cst_94 : f32 to vector<8x32xf32>
    %333 = arith.addf %331, %332 : vector<8x32xf32>
    %334 = vector.extract_strided_slice %328 {offsets = [0, 32], sizes = [8, 32], strides = [1, 1]} : vector<8x128xf32> to vector<8x32xf32>
    %cst_95 = arith.constant 5.000000e-01 : f32
    %335 = vector.broadcast %cst_95 : f32 to vector<8x32xf32>
    %336 = arith.mulf %335, %334 : vector<8x32xf32>
    %cst_96 = arith.constant 5.000000e-01 : f32
    %337 = vector.broadcast %cst_96 : f32 to vector<8x32xf32>
    %338 = arith.addf %336, %337 : vector<8x32xf32>
    %339 = vector.extract_strided_slice %328 {offsets = [0, 64], sizes = [8, 32], strides = [1, 1]} : vector<8x128xf32> to vector<8x32xf32>
    %340 = vector.extract_strided_slice %328 {offsets = [0, 96], sizes = [8, 32], strides = [1, 1]} : vector<8x128xf32> to vector<8x32xf32>
    %cst_97 = arith.constant 5.000000e-01 : f32
    %341 = vector.broadcast %cst_97 : f32 to vector<8x32xf32>
    %342 = arith.mulf %341, %340 : vector<8x32xf32>
    %cst_98 = arith.constant 5.000000e-01 : f32
    %343 = vector.broadcast %cst_98 : f32 to vector<8x32xf32>
    %344 = arith.addf %342, %343 : vector<8x32xf32>
    %345 = arith.mulf %338, %292 : vector<8x32xf32>
    %346 = arith.mulf %333, %339 : vector<8x32xf32>
    %347 = arith.addf %345, %346 : vector<8x32xf32>
    %348 = math.tanh %347 : vector<8x32xf32>
    %349 = arith.mulf %344, %348 : vector<8x32xf32>
    %350 = vector.extract_strided_slice %9 {offsets = [48, 0], sizes = [8, 128], strides = [1, 1]} : vector<64x128xf32> to vector<8x128xf32>
    %cst_99 = arith.constant dense<0.000000e+00> : vector<8x128xf32>
    %351 = tpu.matmul %321, %0, %cst_99 {dimension_numbers = #tpu.dot_dimension_numbers<[1], [0], [0], [1], [0, 0, 1, 1], [], []>} : vector<8x32xf32>, vector<32x128xf32>, vector<8x128xf32> -> vector<8x128xf32>
    %352 = arith.addf %350, %351 : vector<8x128xf32>
    %353 = vector.broadcast %18 : vector<1x128xf32> to vector<8x128xf32>
    %354 = arith.mulf %352, %353 : vector<8x128xf32>
    %355 = math.tanh %354 : vector<8x128xf32>
    %356 = vector.extract_strided_slice %355 {offsets = [0, 0], sizes = [8, 32], strides = [1, 1]} : vector<8x128xf32> to vector<8x32xf32>
    %cst_100 = arith.constant 5.000000e-01 : f32
    %357 = vector.broadcast %cst_100 : f32 to vector<8x32xf32>
    %358 = arith.mulf %357, %356 : vector<8x32xf32>
    %cst_101 = arith.constant 5.000000e-01 : f32
    %359 = vector.broadcast %cst_101 : f32 to vector<8x32xf32>
    %360 = arith.addf %358, %359 : vector<8x32xf32>
    %361 = vector.extract_strided_slice %355 {offsets = [0, 32], sizes = [8, 32], strides = [1, 1]} : vector<8x128xf32> to vector<8x32xf32>
    %cst_102 = arith.constant 5.000000e-01 : f32
    %362 = vector.broadcast %cst_102 : f32 to vector<8x32xf32>
    %363 = arith.mulf %362, %361 : vector<8x32xf32>
    %cst_103 = arith.constant 5.000000e-01 : f32
    %364 = vector.broadcast %cst_103 : f32 to vector<8x32xf32>
    %365 = arith.addf %363, %364 : vector<8x32xf32>
    %366 = vector.extract_strided_slice %355 {offsets = [0, 64], sizes = [8, 32], strides = [1, 1]} : vector<8x128xf32> to vector<8x32xf32>
    %367 = vector.extract_strided_slice %355 {offsets = [0, 96], sizes = [8, 32], strides = [1, 1]} : vector<8x128xf32> to vector<8x32xf32>
    %cst_104 = arith.constant 5.000000e-01 : f32
    %368 = vector.broadcast %cst_104 : f32 to vector<8x32xf32>
    %369 = arith.mulf %368, %367 : vector<8x32xf32>
    %cst_105 = arith.constant 5.000000e-01 : f32
    %370 = vector.broadcast %cst_105 : f32 to vector<8x32xf32>
    %371 = arith.addf %369, %370 : vector<8x32xf32>
    %372 = arith.mulf %365, %319 : vector<8x32xf32>
    %373 = arith.mulf %360, %366 : vector<8x32xf32>
    %374 = arith.addf %372, %373 : vector<8x32xf32>
    %375 = math.tanh %374 : vector<8x32xf32>
    %376 = arith.mulf %371, %375 : vector<8x32xf32>
    %377 = tpu.concatenate %376, %349 in 1 : vector<8x32xf32>, vector<8x32xf32> -> vector<8x64xf32>
    %cst_106 = arith.constant dense<0.000000e+00> : vector<8x128xf32>
    %378 = tpu.matmul %377, %1, %cst_106 {dimension_numbers = #tpu.dot_dimension_numbers<[1], [0], [0], [1], [0, 0, 1, 1], [], []>} : vector<8x64xf32>, vector<64x128xf32>, vector<8x128xf32> -> vector<8x128xf32>
    %379 = vector.broadcast %2 : vector<1x128xf32> to vector<8x128xf32>
    %380 = arith.addf %378, %379 : vector<8x128xf32>
    %381 = vector.broadcast %18 : vector<1x128xf32> to vector<8x128xf32>
    %382 = arith.mulf %380, %381 : vector<8x128xf32>
    %383 = math.tanh %382 : vector<8x128xf32>
    %384 = vector.extract_strided_slice %383 {offsets = [0, 0], sizes = [8, 32], strides = [1, 1]} : vector<8x128xf32> to vector<8x32xf32>
    %cst_107 = arith.constant 5.000000e-01 : f32
    %385 = vector.broadcast %cst_107 : f32 to vector<8x32xf32>
    %386 = arith.mulf %385, %384 : vector<8x32xf32>
    %cst_108 = arith.constant 5.000000e-01 : f32
    %387 = vector.broadcast %cst_108 : f32 to vector<8x32xf32>
    %388 = arith.addf %386, %387 : vector<8x32xf32>
    %389 = vector.extract_strided_slice %383 {offsets = [0, 32], sizes = [8, 32], strides = [1, 1]} : vector<8x128xf32> to vector<8x32xf32>
    %cst_109 = arith.constant 5.000000e-01 : f32
    %390 = vector.broadcast %cst_109 : f32 to vector<8x32xf32>
    %391 = arith.mulf %390, %389 : vector<8x32xf32>
    %cst_110 = arith.constant 5.000000e-01 : f32
    %392 = vector.broadcast %cst_110 : f32 to vector<8x32xf32>
    %393 = arith.addf %391, %392 : vector<8x32xf32>
    %394 = vector.extract_strided_slice %383 {offsets = [0, 64], sizes = [8, 32], strides = [1, 1]} : vector<8x128xf32> to vector<8x32xf32>
    %395 = vector.extract_strided_slice %383 {offsets = [0, 96], sizes = [8, 32], strides = [1, 1]} : vector<8x128xf32> to vector<8x32xf32>
    %cst_111 = arith.constant 5.000000e-01 : f32
    %396 = vector.broadcast %cst_111 : f32 to vector<8x32xf32>
    %397 = arith.mulf %396, %395 : vector<8x32xf32>
    %cst_112 = arith.constant 5.000000e-01 : f32
    %398 = vector.broadcast %cst_112 : f32 to vector<8x32xf32>
    %399 = arith.addf %397, %398 : vector<8x32xf32>
    %400 = arith.mulf %393, %347 : vector<8x32xf32>
    %401 = arith.mulf %388, %394 : vector<8x32xf32>
    %402 = arith.addf %400, %401 : vector<8x32xf32>
    %403 = math.tanh %402 : vector<8x32xf32>
    %404 = arith.mulf %399, %403 : vector<8x32xf32>
    %405 = vector.extract_strided_slice %9 {offsets = [56, 0], sizes = [8, 128], strides = [1, 1]} : vector<64x128xf32> to vector<8x128xf32>
    %cst_113 = arith.constant dense<0.000000e+00> : vector<8x128xf32>
    %406 = tpu.matmul %376, %0, %cst_113 {dimension_numbers = #tpu.dot_dimension_numbers<[1], [0], [0], [1], [0, 0, 1, 1], [], []>} : vector<8x32xf32>, vector<32x128xf32>, vector<8x128xf32> -> vector<8x128xf32>
    %407 = arith.addf %405, %406 : vector<8x128xf32>
    %408 = vector.broadcast %18 : vector<1x128xf32> to vector<8x128xf32>
    %409 = arith.mulf %407, %408 : vector<8x128xf32>
    %410 = math.tanh %409 : vector<8x128xf32>
    %411 = vector.extract_strided_slice %410 {offsets = [0, 0], sizes = [8, 32], strides = [1, 1]} : vector<8x128xf32> to vector<8x32xf32>
    %cst_114 = arith.constant 5.000000e-01 : f32
    %412 = vector.broadcast %cst_114 : f32 to vector<8x32xf32>
    %413 = arith.mulf %412, %411 : vector<8x32xf32>
    %cst_115 = arith.constant 5.000000e-01 : f32
    %414 = vector.broadcast %cst_115 : f32 to vector<8x32xf32>
    %415 = arith.addf %413, %414 : vector<8x32xf32>
    %416 = vector.extract_strided_slice %410 {offsets = [0, 32], sizes = [8, 32], strides = [1, 1]} : vector<8x128xf32> to vector<8x32xf32>
    %cst_116 = arith.constant 5.000000e-01 : f32
    %417 = vector.broadcast %cst_116 : f32 to vector<8x32xf32>
    %418 = arith.mulf %417, %416 : vector<8x32xf32>
    %cst_117 = arith.constant 5.000000e-01 : f32
    %419 = vector.broadcast %cst_117 : f32 to vector<8x32xf32>
    %420 = arith.addf %418, %419 : vector<8x32xf32>
    %421 = vector.extract_strided_slice %410 {offsets = [0, 64], sizes = [8, 32], strides = [1, 1]} : vector<8x128xf32> to vector<8x32xf32>
    %422 = vector.extract_strided_slice %410 {offsets = [0, 96], sizes = [8, 32], strides = [1, 1]} : vector<8x128xf32> to vector<8x32xf32>
    %cst_118 = arith.constant 5.000000e-01 : f32
    %423 = vector.broadcast %cst_118 : f32 to vector<8x32xf32>
    %424 = arith.mulf %423, %422 : vector<8x32xf32>
    %cst_119 = arith.constant 5.000000e-01 : f32
    %425 = vector.broadcast %cst_119 : f32 to vector<8x32xf32>
    %426 = arith.addf %424, %425 : vector<8x32xf32>
    %427 = arith.mulf %420, %374 : vector<8x32xf32>
    %428 = arith.mulf %415, %421 : vector<8x32xf32>
    %429 = arith.addf %427, %428 : vector<8x32xf32>
    %430 = math.tanh %429 : vector<8x32xf32>
    %431 = arith.mulf %426, %430 : vector<8x32xf32>
    %432 = tpu.concatenate %431, %404 in 1 : vector<8x32xf32>, vector<8x32xf32> -> vector<8x64xf32>
    %cst_120 = arith.constant dense<0.000000e+00> : vector<8x128xf32>
    %433 = tpu.matmul %432, %1, %cst_120 {dimension_numbers = #tpu.dot_dimension_numbers<[1], [0], [0], [1], [0, 0, 1, 1], [], []>} : vector<8x64xf32>, vector<64x128xf32>, vector<8x128xf32> -> vector<8x128xf32>
    %434 = vector.broadcast %2 : vector<1x128xf32> to vector<8x128xf32>
    %435 = arith.addf %433, %434 : vector<8x128xf32>
    %436 = vector.broadcast %18 : vector<1x128xf32> to vector<8x128xf32>
    %437 = arith.mulf %435, %436 : vector<8x128xf32>
    %438 = math.tanh %437 : vector<8x128xf32>
    %439 = vector.extract_strided_slice %438 {offsets = [0, 0], sizes = [8, 32], strides = [1, 1]} : vector<8x128xf32> to vector<8x32xf32>
    %cst_121 = arith.constant 5.000000e-01 : f32
    %440 = vector.broadcast %cst_121 : f32 to vector<8x32xf32>
    %441 = arith.mulf %440, %439 : vector<8x32xf32>
    %cst_122 = arith.constant 5.000000e-01 : f32
    %442 = vector.broadcast %cst_122 : f32 to vector<8x32xf32>
    %443 = arith.addf %441, %442 : vector<8x32xf32>
    %444 = vector.extract_strided_slice %438 {offsets = [0, 32], sizes = [8, 32], strides = [1, 1]} : vector<8x128xf32> to vector<8x32xf32>
    %cst_123 = arith.constant 5.000000e-01 : f32
    %445 = vector.broadcast %cst_123 : f32 to vector<8x32xf32>
    %446 = arith.mulf %445, %444 : vector<8x32xf32>
    %cst_124 = arith.constant 5.000000e-01 : f32
    %447 = vector.broadcast %cst_124 : f32 to vector<8x32xf32>
    %448 = arith.addf %446, %447 : vector<8x32xf32>
    %449 = vector.extract_strided_slice %438 {offsets = [0, 64], sizes = [8, 32], strides = [1, 1]} : vector<8x128xf32> to vector<8x32xf32>
    %450 = vector.extract_strided_slice %438 {offsets = [0, 96], sizes = [8, 32], strides = [1, 1]} : vector<8x128xf32> to vector<8x32xf32>
    %cst_125 = arith.constant 5.000000e-01 : f32
    %451 = vector.broadcast %cst_125 : f32 to vector<8x32xf32>
    %452 = arith.mulf %451, %450 : vector<8x32xf32>
    %cst_126 = arith.constant 5.000000e-01 : f32
    %453 = vector.broadcast %cst_126 : f32 to vector<8x32xf32>
    %454 = arith.addf %452, %453 : vector<8x32xf32>
    %455 = arith.mulf %448, %402 : vector<8x32xf32>
    %456 = arith.mulf %443, %449 : vector<8x32xf32>
    %457 = arith.addf %455, %456 : vector<8x32xf32>
    %458 = math.tanh %457 : vector<8x32xf32>
    %459 = arith.mulf %454, %458 : vector<8x32xf32>
    %c0_127 = arith.constant 0 : index
    %c0_128 = arith.constant 0 : index
    %460 = vector.load %arg7[%c0_127, %c0_128] : memref<1x32xf32, #tpu.memory_space<vmem>>, vector<1x32xf32>
    %461 = vector.broadcast %460 : vector<1x32xf32> to vector<8x32xf32>
    %462 = arith.mulf %459, %461 : vector<8x32xf32>
    %cst_129 = arith.constant dense<0.000000e+00> : vector<8xf32>
    %463 = vector.multi_reduction <add>, %462, %cst_129 [1] : vector<8x32xf32> to vector<8xf32>
    %464 = vector.shape_cast %463 : vector<8xf32> to vector<8x1xf32>
    %c0_130 = arith.constant 0 : index
    %c0_131 = arith.constant 0 : index
    %465 = vector.load %arg8[%c0_130, %c0_131] : memref<1x1xf32, #tpu.memory_space<vmem>>, vector<1x1xf32>
    %466 = vector.broadcast %465 : vector<1x1xf32> to vector<8x1xf32>
    %467 = arith.addf %464, %466 : vector<8x1xf32>
    %c0_132 = arith.constant 0 : index
    %c0_133 = arith.constant 0 : index
    %468 = vector.load %arg9[%c0_132, %c0_133] : memref<8x1xf32, #tpu.memory_space<vmem>>, vector<8x1xf32>
    tpu.vector_store %arg9[%c0_132, %c0_133], %467 {strides = array<i32>} : memref<8x1xf32, #tpu.memory_space<vmem>>, vector<8x1xf32>,
    return
  }
  func.func @transform_0(%arg0: i32) -> (i32, i32, i32) {
    %c0_i32 = arith.constant 0 : i32
    %c0_i32_0 = arith.constant 0 : i32
    %c0_i32_1 = arith.constant 0 : i32
    return %c0_i32, %arg0, %c0_i32_0 : i32, i32, i32
  }
  func.func @transform_1(%arg0: i32) -> (i32, i32) {
    %c0_i32 = arith.constant 0 : i32
    %c0_i32_0 = arith.constant 0 : i32
    %c0_i32_1 = arith.constant 0 : i32
    return %c0_i32, %c0_i32_0 : i32, i32
  }
  func.func @transform_2(%arg0: i32) -> (i32, i32) {
    %c0_i32 = arith.constant 0 : i32
    %c0_i32_0 = arith.constant 0 : i32
    %c0_i32_1 = arith.constant 0 : i32
    return %c0_i32, %c0_i32_0 : i32, i32
  }
  func.func @transform_3(%arg0: i32) -> (i32, i32) {
    %c0_i32 = arith.constant 0 : i32
    %c0_i32_0 = arith.constant 0 : i32
    %c0_i32_1 = arith.constant 0 : i32
    return %c0_i32, %c0_i32_0 : i32, i32
  }
  func.func @transform_4(%arg0: i32) -> (i32, i32) {
    %c0_i32 = arith.constant 0 : i32
    %c0_i32_0 = arith.constant 0 : i32
    %c0_i32_1 = arith.constant 0 : i32
    return %c0_i32, %c0_i32_0 : i32, i32
  }
  func.func @transform_5(%arg0: i32) -> (i32, i32) {
    %c0_i32 = arith.constant 0 : i32
    %c0_i32_0 = arith.constant 0 : i32
    %c0_i32_1 = arith.constant 0 : i32
    return %c0_i32, %c0_i32_0 : i32, i32
  }
  func.func @transform_6(%arg0: i32) -> (i32, i32) {
    %c0_i32 = arith.constant 0 : i32
    %c0_i32_0 = arith.constant 0 : i32
    %c0_i32_1 = arith.constant 0 : i32
    return %c0_i32, %c0_i32_0 : i32, i32
  }
  func.func @transform_7(%arg0: i32) -> (i32, i32) {
    %c0_i32 = arith.constant 0 : i32
    %c0_i32_0 = arith.constant 0 : i32
    %c0_i32_1 = arith.constant 0 : i32
    return %c0_i32, %c0_i32_0 : i32, i32
  }
  func.func @transform_8(%arg0: i32) -> (i32, i32) {
    %c0_i32 = arith.constant 0 : i32
    %c0_i32_0 = arith.constant 0 : i32
    return %arg0, %c0_i32 : i32, i32
  }
}

</mosaic_0001>

<llo_original>
// kernel: lstm_regressor_forward.1
$region0: #{lstm_regressor_forward.1}
  #allocation0 [shape = 'u32[]', space=smem, size = 0x4, offset = 0x4, fixed_abs, tag = 'smem constant byte address 0x4 - core index']
  #allocation1 [shape = 'u32[144,128]{1,0:T(1,128)}', space=vmem, size = 0x12000, scoped, tag = 'internal scratch']
  #allocation2 [shape = 'f32[1,1]{1,0:T(1,128)S(1)}', space=vmem, size = 0x200, scoped, tag = 'scoped memory for lstm_regressor_forward.1']
  %s0 = inlined_call_operand.vmem [shape: f32[8,8,4], index: 0, kind: input, shape index: {}]
  %s1 = inlined_call_operand.vmem [shape: f32[4,128], index: 1, kind: input, shape index: {}]
  %s2 = inlined_call_operand.vmem [shape: f32[32,128], index: 2, kind: input, shape index: {}]
  %s3 = inlined_call_operand.vmem [shape: f32[1,128], index: 3, kind: input, shape index: {}]
  %s4 = inlined_call_operand.vmem [shape: f32[64,128], index: 4, kind: input, shape index: {}]
  %s5 = inlined_call_operand.vmem [shape: f32[1,128], index: 5, kind: input, shape index: {}]
  %s6 = inlined_call_operand.vmem [shape: f32[1,32], index: 6, kind: input, shape index: {}]
  %s7 = inlined_call_operand.<no memory space> [shape: f32[1,1], index: 7, kind: input, shape index: {}]
  %s8 = inlined_call_operand.vmem [shape: f32[8,1], index: 8, kind: output, shape index: {}]
  %s9 = sld [smem:[#allocation0]]
  $region42: #{lstm_regressor_forward.1} parent=0
    _
  %s11 = ssub.s32 1, %s9
  %s12 = scalar_select 0, %s11, %s9
  %v13 = vstv %s7
  %14 = vst [vmem:[#allocation2] sm:$0x1] %v13
  // Predicated region
  $region2: #{lstm_regressor_forward.1} parent=0 // pred_check
    _
  $region3: #{lstm_regressor_forward.1} parent=0 // pred_check_branch
    %16 = sbr.rel (0) target = $region5
  $region4: #{lstm_regressor_forward.1} parent=0 // pred_region
    _
  $region5: #{lstm_regressor_forward.1} parent=0 // pred_fallthru
    _
  // Predicated region
  $region6: #{lstm_regressor_forward.1} parent=0 // pred_check
    _
  $region7: #{lstm_regressor_forward.1} parent=0 // pred_check_branch
    %18 = sbr.rel (0) target = $region9
  $region8: #{lstm_regressor_forward.1} parent=0 // pred_region
    _
  $region9: #{lstm_regressor_forward.1} parent=0 // pred_fallthru
    _
  // Predicated region
  $region10: #{lstm_regressor_forward.1} parent=0 // pred_check
    _
  $region11: #{lstm_regressor_forward.1} parent=0 // pred_check_branch
    %20 = sbr.rel (0) target = $region13
  $region12: #{lstm_regressor_forward.1} parent=0 // pred_region
    _
  $region13: #{lstm_regressor_forward.1} parent=0 // pred_fallthru
    _
  // Predicated region
  $region14: #{lstm_regressor_forward.1} parent=0 // pred_check
    _
  $region15: #{lstm_regressor_forward.1} parent=0 // pred_check_branch
    %22 = sbr.rel (0) target = $region17
  $region16: #{lstm_regressor_forward.1} parent=0 // pred_region
    _
  $region17: #{lstm_regressor_forward.1} parent=0 // pred_fallthru
    _
  // Predicated region
  $region18: #{lstm_regressor_forward.1} parent=0 // pred_check
    _
  $region19: #{lstm_regressor_forward.1} parent=0 // pred_check_branch
    %24 = sbr.rel (0) target = $region21
  $region20: #{lstm_regressor_forward.1} parent=0 // pred_region
    _
  $region21: #{lstm_regressor_forward.1} parent=0 // pred_fallthru
    _
  // Predicated region
  $region22: #{lstm_regressor_forward.1} parent=0 // pred_check
    _
  $region23: #{lstm_regressor_forward.1} parent=0 // pred_check_branch
    %26 = sbr.rel (0) target = $region25
  $region24: #{lstm_regressor_forward.1} parent=0 // pred_region
    _
  $region25: #{lstm_regressor_forward.1} parent=0 // pred_fallthru
    _
  // Predicated region
  $region26: #{lstm_regressor_forward.1} parent=0 // pred_check
    _
  $region27: #{lstm_regressor_forward.1} parent=0 // pred_check_branch
    %28 = sbr.rel (0) target = $region29
  $region28: #{lstm_regressor_forward.1} parent=0 // pred_region
    _
  $region29: #{lstm_regressor_forward.1} parent=0 // pred_fallthru
    _
  // Predicated region
  $region30: #{lstm_regressor_forward.1} parent=0 // pred_check
    _
  $region31: #{lstm_regressor_forward.1} parent=0 // pred_check_branch
    %30 = sbr.rel (0) target = $region33
  $region32: #{lstm_regressor_forward.1} parent=0 // pred_region
    _
  $region33: #{lstm_regressor_forward.1} parent=0 // pred_fallthru
    _
  %v31 = vld [vmem:[%s2] sm:$0xff]
  %v32 = vld [vmem:[%s2 + $0x8] sm:$0xff]
  %v33 = vld [vmem:[%s2 + $0x10] sm:$0xff]
  %v34 = vld [vmem:[%s2 + $0x18] sm:$0xff]
  %v35 = vld [vmem:[%s4] sm:$0xff]
  %v36 = vld [vmem:[%s4 + $0x8] sm:$0xff]
  %v37 = vld [vmem:[%s4 + $0x10] sm:$0xff]
  %v38 = vld [vmem:[%s4 + $0x18] sm:$0xff]
  %v39 = vld [vmem:[%s4 + $0x20] sm:$0xff]
  %v40 = vld [vmem:[%s4 + $0x28] sm:$0xff]
  %v41 = vld [vmem:[%s4 + $0x30] sm:$0xff]
  %v42 = vld [vmem:[%s4 + $0x38] sm:$0xff]
  %v43 = vld [vmem:[%s5] sm:$0x1]
  %v44 = vld [vmem:[%s0] sm:$0xff]
  %v45 = vld [vmem:[%s0 + $0x8] sm:$0xff]
  %v46 = vld [vmem:[%s0 + $0x10] sm:$0xff]
  %v47 = vld [vmem:[%s0 + $0x18] sm:$0xff]
  %v48 = vld [vmem:[%s0 + $0x20] sm:$0xff]
  %v49 = vld [vmem:[%s0 + $0x28] sm:$0xff]
  %v50 = vld [vmem:[%s0 + $0x30] sm:$0xff]
  %v51 = vld [vmem:[%s0 + $0x38] sm:$0xff]
  %v52 = vld [vmem:[%s1] sm:$0xf]
  %v53 = vld [vmem:[%s3] sm:$0x1]
  %v55 = vlaneseq
  %v56 = vshrl.u32 %v55, 7
  %v57 = vsub.s32 0, %v56
  %v58 = vrot.slane %v53, %v57
  %vm60 = vcmask 31744
  %v62 = vsel %vm60, %v44, 0
  %v65 = vsel %vm60, %v45, 0
  %v68 = vsel %vm60, %v46, 0
  %v71 = vsel %vm60, %v47, 0
  %v74 = vsel %vm60, %v48, 0
  %v77 = vsel %vm60, %v49, 0
  %v80 = vsel %vm60, %v50, 0
  %v83 = vsel %vm60, %v51, 0
  %vm85 = vcmask 1043456
  %v87 = vsel %vm85, %v52, 0
  %89 = vmatprep.subr.mxu0 0.0
  %90 = vmatpush1.msra.mxu0 %v87
  %91 = vmatprep.subr.mxu0 0.0
  %92 = vmatpush1.msra.mxu0 0.0
  %93 = vmatprep.subr.mxu0 0.0
  %94 = vmatpush1.msra.mxu0 0.0
  %95 = vmatprep.subr.mxu0 0.0
  %96 = vmatpush1.msra.mxu0 0.0
  %97 = vmatprep.subr.mxu0 0.0
  %98 = vmatpush1.msra.mxu0 0.0
  %99 = vmatprep.subr.mxu0 0.0
  %100 = vmatpush1.msra.mxu0 0.0
  %101 = vmatprep.subr.mxu0 0.0
  %102 = vmatpush1.msra.mxu0 0.0
  %103 = vmatprep.subr.mxu0 0.0
  %104 = vmatpush1.msra.mxu0 0.0
  %105 = vmatprep.subr.mxu0 0.0
  %106 = vmatpush1.msra.mxu0 0.0
  %107 = vmatprep.subr.mxu0 0.0
  %108 = vmatpush1.msra.mxu0 0.0
  %109 = vmatprep.subr.mxu0 0.0
  %110 = vmatpush1.msra.mxu0 0.0
  %111 = vmatprep.subr.mxu0 0.0
  %112 = vmatpush1.msra.mxu0 0.0
  %113 = vmatprep.subr.mxu0 0.0
  %114 = vmatpush1.msra.mxu0 0.0
  %115 = vmatprep.subr.mxu0 0.0
  %116 = vmatpush1.msra.mxu0 0.0
  %117 = vmatprep.subr.mxu0 0.0
  %118 = vmatpush1.msra.mxu0 0.0
  %119 = vmatprep.subr.mxu0 0.0
  %120 = vmatpush1.msra.mxu0 0.0
  %121 = vmatprep.subr.mxu0 0.0
  %122 = vmatpush1.msra.mxu0 0.0
  %123 = vmatprep.subr.mxu0 0.0
  %124 = vmatpush1.msra.mxu0 0.0
  %125 = vmatprep.subr.mxu0 0.0
  %126 = vmatpush1.msra.mxu0 0.0
  %127 = vmatprep.subr.mxu0 0.0
  %128 = vmatpush1.msra.mxu0 0.0
  %129 = vmatprep.subr.mxu0 0.0
  %130 = vmatpush1.msra.mxu0 0.0
  %131 = vmatprep.subr.mxu0 0.0
  %132 = vmatpush1.msra.mxu0 0.0
  %133 = vmatprep.subr.mxu0 0.0
  %134 = vmatpush1.msra.mxu0 0.0
  %135 = vmatprep.subr.mxu0 0.0
  %136 = vmatpush1.msra.mxu0 0.0
  %137 = vmatprep.subr.mxu0 0.0
  %138 = vmatpush1.msra.mxu0 0.0
  %139 = vmatprep.subr.mxu0 0.0
  %140 = vmatpush1.msra.mxu0 0.0
  %141 = vmatprep.subr.mxu0 0.0
  %142 = vmatpush1.msra.mxu0 0.0
  %143 = vmatprep.subr.mxu0 0.0
  %144 = vmatpush1.msra.mxu0 0.0
  %145 = vmatprep.subr.mxu0 0.0
  %146 = vmatpush1.msra.mxu0 0.0
  %147 = vmatprep.subr.mxu0 0.0
  %148 = vmatpush1.msra.mxu0 0.0
  %149 = vmatprep.subr.mxu0 0.0
  %150 = vmatpush1.msra.mxu0 0.0
  %151 = vmatprep.subr.mxu0 0.0
  %152 = vmatpush1.msra.mxu0 0.0
  %153 = vmatprep.mubr.f32.mxu0 0.0
  %154 = vmatmul.mubr.f32.gmra.mrb[0].mxu0 %v62
  %v155 = vpop.f32.mrb[0].mxu0
  %v156 = vadd.f32 %v58, %v155
  %v157 = vpop.f32.mrb[0].mxu0
  %158 = vmatprep.mubr.f32.mxu0 0.0
  %159 = vmatmul.mubr.f32.gmra.mrb[0].mxu0 %v65
  %v160 = vpop.f32.mrb[0].mxu0
  %v161 = vadd.f32 %v58, %v160
  %v162 = vpop.f32.mrb[0].mxu0
  %163 = vmatprep.mubr.f32.mxu0 0.0
  %164 = vmatmul.mubr.f32.gmra.mrb[0].mxu0 %v68
  %v165 = vpop.f32.mrb[0].mxu0
  %v166 = vadd.f32 %v58, %v165
  %v167 = vpop.f32.mrb[0].mxu0
  %168 = vmatprep.mubr.f32.mxu0 0.0
  %169 = vmatmul.mubr.f32.gmra.mrb[0].mxu0 %v71
  %v170 = vpop.f32.mrb[0].mxu0
  %v171 = vadd.f32 %v58, %v170
  %v172 = vpop.f32.mrb[0].mxu0
  %173 = vmatprep.mubr.f32.mxu0 0.0
  %174 = vmatmul.mubr.f32.gmra.mrb[0].mxu0 %v74
  %v175 = vpop.f32.mrb[0].mxu0
  %v176 = vadd.f32 %v58, %v175
  %v177 = vpop.f32.mrb[0].mxu0
  %178 = vmatprep.mubr.f32.mxu0 0.0
  %179 = vmatmul.mubr.f32.gmra.mrb[0].mxu0 %v77
  %v180 = vpop.f32.mrb[0].mxu0
  %v181 = vadd.f32 %v58, %v180
  %v182 = vpop.f32.mrb[0].mxu0
  %183 = vmatprep.mubr.f32.mxu0 0.0
  %184 = vmatmul.mubr.f32.gmra.mrb[0].mxu0 %v80
  %v185 = vpop.f32.mrb[0].mxu0
  %v186 = vadd.f32 %v58, %v185
  %v187 = vpop.f32.mrb[0].mxu0
  %188 = vmatprep.mubr.f32.mxu0 0.0
  %189 = vmatmul.mubr.f32.gmra.mrb[0].mxu0 %v83
  %v190 = vpop.f32.mrb[0].mxu0
  %v191 = vadd.f32 %v58, %v190
  %v192 = vpop.f32.mrb[0].mxu0
  %193 = vdwg.mxu0
  %v194 = vlaneseq
  %v195 = vand.u32 %v194, 127
  %vm196 = vcmp.ge.s32.totalorder %v195, 64
  %vm197 = vcmp.lt.s32.totalorder %v195, 96
  %vm198 = vmand %vm196, %vm197
  %v199 = vsel %vm198, 1.0, 0.5
  %vm200 = vcmask 261120
  %v202 = vsel %vm200, 0.0, 0
  %204 = vmatprep.subr.mxu0 0.0
  %205 = vmatpush1.msra.mxu0 %v31
  %206 = vmatprep.subr.mxu0 0.0
  %207 = vmatpush1.msra.mxu0 %v32
  %208 = vmatprep.subr.mxu0 0.0
  %209 = vmatpush1.msra.mxu0 %v33
  %210 = vmatprep.subr.mxu0 0.0
  %211 = vmatpush1.msra.mxu0 %v34
  %212 = vmatprep.subr.mxu0 0.0
  %213 = vmatpush1.msra.mxu0 0.0
  %214 = vmatprep.subr.mxu0 0.0
  %215 = vmatpush1.msra.mxu0 0.0
  %216 = vmatprep.subr.mxu0 0.0
  %217 = vmatpush1.msra.mxu0 0.0
  %218 = vmatprep.subr.mxu0 0.0
  %219 = vmatpush1.msra.mxu0 0.0
  %220 = vmatprep.subr.mxu0 0.0
  %221 = vmatpush1.msra.mxu0 0.0
  %222 = vmatprep.subr.mxu0 0.0
  %223 = vmatpush1.msra.mxu0 0.0
  %224 = vmatprep.subr.mxu0 0.0
  %225 = vmatpush1.msra.mxu0 0.0
  %226 = vmatprep.subr.mxu0 0.0
  %227 = vmatpush1.msra.mxu0 0.0
  %228 = vmatprep.subr.mxu0 0.0
  %229 = vmatpush1.msra.mxu0 0.0
  %230 = vmatprep.subr.mxu0 0.0
  %231 = vmatpush1.msra.mxu0 0.0
  %232 = vmatprep.subr.mxu0 0.0
  %233 = vmatpush1.msra.mxu0 0.0
  %234 = vmatprep.subr.mxu0 0.0
  %235 = vmatpush1.msra.mxu0 0.0
  %236 = vmatprep.subr.mxu0 0.0
  %237 = vmatpush1.msra.mxu0 0.0
  %238 = vmatprep.subr.mxu0 0.0
  %239 = vmatpush1.msra.mxu0 0.0
  %240 = vmatprep.subr.mxu0 0.0
  %241 = vmatpush1.msra.mxu0 0.0
  %242 = vmatprep.subr.mxu0 0.0
  %243 = vmatpush1.msra.mxu0 0.0
  %244 = vmatprep.subr.mxu0 0.0
  %245 = vmatpush1.msra.mxu0 0.0
  %246 = vmatprep.subr.mxu0 0.0
  %247 = vmatpush1.msra.mxu0 0.0
  %248 = vmatprep.subr.mxu0 0.0
  %249 = vmatpush1.msra.mxu0 0.0
  %250 = vmatprep.subr.mxu0 0.0
  %251 = vmatpush1.msra.mxu0 0.0
  %252 = vmatprep.subr.mxu0 0.0
  %253 = vmatpush1.msra.mxu0 0.0
  %254 = vmatprep.subr.mxu0 0.0
  %255 = vmatpush1.msra.mxu0 0.0
  %256 = vmatprep.subr.mxu0 0.0
  %257 = vmatpush1.msra.mxu0 0.0
  %258 = vmatprep.subr.mxu0 0.0
  %259 = vmatpush1.msra.mxu0 0.0
  %260 = vmatprep.subr.mxu0 0.0
  %261 = vmatpush1.msra.mxu0 0.0
  %262 = vmatprep.subr.mxu0 0.0
  %263 = vmatpush1.msra.mxu0 0.0
  %264 = vmatprep.subr.mxu0 0.0
  %265 = vmatpush1.msra.mxu0 0.0
  %266 = vmatprep.subr.mxu0 0.0
  %267 = vmatpush1.msra.mxu0 0.0
  %268 = vmatprep.mubr.f32.mxu0 0.0
  %269 = vmatmul.mubr.f32.gmra.mrb[0].mxu0 %v202
  %v270 = vpop.f32.mrb[0].mxu0
  %v271 = vadd.f32 0.0, %v270
  %v272 = vpop.f32.mrb[0].mxu0
  %273 = vdwg.mxu0
  %v274 = vadd.f32 %v156, %v271
  %v275 = vmul.f32 %v274, %v199
  %v276 = vtanh.pop %v275
  %v277 = vmul.f32 %v276, 0.5
  %v278 = vadd.f32 %v277, 0.5
  %v279 = vmul.f32 %v278, 0.0
  %281 = vrot.lane.b32.xlu0 %v276, 64
  %v282 = vpop.permute.xlu0 %281
  %v284 = vmul.f32 %v278, %v282
  %286 = vrot.lane.b32.xlu0 %v284, 32
  %v287 = vpop.permute.xlu0 %286
  %v289 = vadd.f32 %v279, %v287
  %v290 = vtanh.pop %v289
  %292 = vrot.lane.b32.xlu0 %v290, 64
  %v293 = vpop.permute.xlu0 %292
  %v295 = vmul.f32 %v278, %v293
  %297 = vrot.lane.b32.xlu0 %v295, 32
  %v298 = vpop.permute.xlu0 %297
  %v300 = vsel %vm200, %v298, 0.0
  %v302 = vlaneseq
  %v303 = vshrl.u32 %v302, 7
  %v304 = vsub.s32 0, %v303
  %v305 = vrot.slane %v43, %v304
  %vm307 = vcmask 523264
  %v309 = vsel %vm307, %v300, 0
  %311 = vmatprep.subr.mxu0 0.0
  %312 = vmatpush1.msra.mxu0 %v35
  %313 = vmatprep.subr.mxu0 0.0
  %314 = vmatpush1.msra.mxu0 %v36
  %315 = vmatprep.subr.mxu0 0.0
  %316 = vmatpush1.msra.mxu0 %v37
  %317 = vmatprep.subr.mxu0 0.0
  %318 = vmatpush1.msra.mxu0 %v38
  %319 = vmatprep.subr.mxu0 0.0
  %320 = vmatpush1.msra.mxu0 %v39
  %321 = vmatprep.subr.mxu0 0.0
  %322 = vmatpush1.msra.mxu0 %v40
  %323 = vmatprep.subr.mxu0 0.0
  %324 = vmatpush1.msra.mxu0 %v41
  %325 = vmatprep.subr.mxu0 0.0
  %326 = vmatpush1.msra.mxu0 %v42
  %327 = vmatprep.subr.mxu0 0.0
  %328 = vmatpush1.msra.mxu0 0.0
  %329 = vmatprep.subr.mxu0 0.0
  %330 = vmatpush1.msra.mxu0 0.0
  %331 = vmatprep.subr.mxu0 0.0
  %332 = vmatpush1.msra.mxu0 0.0
  %333 = vmatprep.subr.mxu0 0.0
  %334 = vmatpush1.msra.mxu0 0.0
  %335 = vmatprep.subr.mxu0 0.0
  %336 = vmatpush1.msra.mxu0 0.0
  %337 = vmatprep.subr.mxu0 0.0
  %338 = vmatpush1.msra.mxu0 0.0
  %339 = vmatprep.subr.mxu0 0.0
  %340 = vmatpush1.msra.mxu0 0.0
  %341 = vmatprep.subr.mxu0 0.0
  %342 = vmatpush1.msra.mxu0 0.0
  %343 = vmatprep.subr.mxu0 0.0
  %344 = vmatpush1.msra.mxu0 0.0
  %345 = vmatprep.subr.mxu0 0.0
  %346 = vmatpush1.msra.mxu0 0.0
  %347 = vmatprep.subr.mxu0 0.0
  %348 = vmatpush1.msra.mxu0 0.0
  %349 = vmatprep.subr.mxu0 0.0
  %350 = vmatpush1.msra.mxu0 0.0
  %351 = vmatprep.subr.mxu0 0.0
  %352 = vmatpush1.msra.mxu0 0.0
  %353 = vmatprep.subr.mxu0 0.0
  %354 = vmatpush1.msra.mxu0 0.0
  %355 = vmatprep.subr.mxu0 0.0
  %356 = vmatpush1.msra.mxu0 0.0
  %357 = vmatprep.subr.mxu0 0.0
  %358 = vmatpush1.msra.mxu0 0.0
  %359 = vmatprep.subr.mxu0 0.0
  %360 = vmatpush1.msra.mxu0 0.0
  %361 = vmatprep.subr.mxu0 0.0
  %362 = vmatpush1.msra.mxu0 0.0
  %363 = vmatprep.subr.mxu0 0.0
  %364 = vmatpush1.msra.mxu0 0.0
  %365 = vmatprep.subr.mxu0 0.0
  %366 = vmatpush1.msra.mxu0 0.0
  %367 = vmatprep.subr.mxu0 0.0
  %368 = vmatpush1.msra.mxu0 0.0
  %369 = vmatprep.subr.mxu0 0.0
  %370 = vmatpush1.msra.mxu0 0.0
  %371 = vmatprep.subr.mxu0 0.0
  %372 = vmatpush1.msra.mxu0 0.0
  %373 = vmatprep.subr.mxu0 0.0
  %374 = vmatpush1.msra.mxu0 0.0
  %375 = vmatprep.mubr.f32.mxu0 0.0
  %376 = vmatmul.mubr.f32.gmra.mrb[0].mxu0 %v309
  %v377 = vpop.f32.mrb[0].mxu0
  %v378 = vadd.f32 %v305, %v377
  %v379 = vpop.f32.mrb[0].mxu0
  %380 = vdwg.mxu0
  %v381 = vmul.f32 %v378, %v199
  %v382 = vtanh.pop %v381
  %v383 = vmul.f32 %v382, 0.5
  %v384 = vadd.f32 %v383, 0.5
  %v385 = vmul.f32 %v384, 0.0
  %387 = vrot.lane.b32.xlu0 %v382, 64
  %v388 = vpop.permute.xlu0 %387
  %v390 = vmul.f32 %v384, %v388
  %392 = vrot.lane.b32.xlu0 %v390, 32
  %v393 = vpop.permute.xlu0 %392
  %v395 = vadd.f32 %v385, %v393
  %v396 = vtanh.pop %v395
  %398 = vrot.lane.b32.xlu0 %v396, 64
  %v399 = vpop.permute.xlu0 %398
  %v401 = vmul.f32 %v384, %v399
  %v402 = vsel %vm200, %v298, 0
  %404 = vmatprep.subr.mxu0 0.0
  %405 = vmatpush1.msra.mxu0 %v31
  %406 = vmatprep.subr.mxu0 0.0
  %407 = vmatpush1.msra.mxu0 %v32
  %408 = vmatprep.subr.mxu0 0.0
  %409 = vmatpush1.msra.mxu0 %v33
  %410 = vmatprep.subr.mxu0 0.0
  %411 = vmatpush1.msra.mxu0 %v34
  %412 = vmatprep.subr.mxu0 0.0
  %413 = vmatpush1.msra.mxu0 0.0
  %414 = vmatprep.subr.mxu0 0.0
  %415 = vmatpush1.msra.mxu0 0.0
  %416 = vmatprep.subr.mxu0 0.0
  %417 = vmatpush1.msra.mxu0 0.0
  %418 = vmatprep.subr.mxu0 0.0
  %419 = vmatpush1.msra.mxu0 0.0
  %420 = vmatprep.subr.mxu0 0.0
  %421 = vmatpush1.msra.mxu0 0.0
  %422 = vmatprep.subr.mxu0 0.0
  %423 = vmatpush1.msra.mxu0 0.0
  %424 = vmatprep.subr.mxu0 0.0
  %425 = vmatpush1.msra.mxu0 0.0
  %426 = vmatprep.subr.mxu0 0.0
  %427 = vmatpush1.msra.mxu0 0.0
  %428 = vmatprep.subr.mxu0 0.0
  %429 = vmatpush1.msra.mxu0 0.0
  %430 = vmatprep.subr.mxu0 0.0
  %431 = vmatpush1.msra.mxu0 0.0
  %432 = vmatprep.subr.mxu0 0.0
  %433 = vmatpush1.msra.mxu0 0.0
  %434 = vmatprep.subr.mxu0 0.0
  %435 = vmatpush1.msra.mxu0 0.0
  %436 = vmatprep.subr.mxu0 0.0
  %437 = vmatpush1.msra.mxu0 0.0
  %438 = vmatprep.subr.mxu0 0.0
  %439 = vmatpush1.msra.mxu0 0.0
  %440 = vmatprep.subr.mxu0 0.0
  %441 = vmatpush1.msra.mxu0 0.0
  %442 = vmatprep.subr.mxu0 0.0
  %443 = vmatpush1.msra.mxu0 0.0
  %444 = vmatprep.subr.mxu0 0.0
  %445 = vmatpush1.msra.mxu0 0.0
  %446 = vmatprep.subr.mxu0 0.0
  %447 = vmatpush1.msra.mxu0 0.0
  %448 = vmatprep.subr.mxu0 0.0
  %449 = vmatpush1.msra.mxu0 0.0
  %450 = vmatprep.subr.mxu0 0.0
  %451 = vmatpush1.msra.mxu0 0.0
  %452 = vmatprep.subr.mxu0 0.0
  %453 = vmatpush1.msra.mxu0 0.0
  %454 = vmatprep.subr.mxu0 0.0
  %455 = vmatpush1.msra.mxu0 0.0
  %456 = vmatprep.subr.mxu0 0.0
  %457 = vmatpush1.msra.mxu0 0.0
  %458 = vmatprep.subr.mxu0 0.0
  %459 = vmatpush1.msra.mxu0 0.0
  %460 = vmatprep.subr.mxu0 0.0
  %461 = vmatpush1.msra.mxu0 0.0
  %462 = vmatprep.subr.mxu0 0.0
  %463 = vmatpush1.msra.mxu0 0.0
  %464 = vmatprep.subr.mxu0 0.0
  %465 = vmatpush1.msra.mxu0 0.0
  %466 = vmatprep.subr.mxu0 0.0
  %467 = vmatpush1.msra.mxu0 0.0
  %468 = vmatprep.mubr.f32.mxu0 0.0
  %469 = vmatmul.mubr.f32.gmra.mrb[0].mxu0 %v402
  %v470 = vpop.f32.mrb[0].mxu0
  %v471 = vadd.f32 0.0, %v470
  %v472 = vpop.f32.mrb[0].mxu0
  %473 = vdwg.mxu0
  %v474 = vadd.f32 %v161, %v471
  %v475 = vmul.f32 %v474, %v199
  %v476 = vtanh.pop %v475
  %v477 = vmul.f32 %v476, 0.5
  %v478 = vadd.f32 %v477, 0.5
  %v479 = vmul.f32 %v478, %v289
  %481 = vrot.lane.b32.xlu0 %v476, 64
  %v482 = vpop.permute.xlu0 %481
  %v484 = vmul.f32 %v478, %v482
  %486 = vrot.lane.b32.xlu0 %v484, 32
  %v487 = vpop.permute.xlu0 %486
  %v489 = vadd.f32 %v479, %v487
  %v490 = vtanh.pop %v489
  %492 = vrot.lane.b32.xlu0 %v490, 64
  %v493 = vpop.permute.xlu0 %492
  %v495 = vmul.f32 %v478, %v493
  %497 = vrot.lane.b32.xlu0 %v495, 32
  %v498 = vpop.permute.xlu0 %497
  %501 = vrot.lane.b32.xlu0 %v401, 64
  %v502 = vpop.permute.xlu0 %501
  %v504 = vsel %vm200, %v498, %v502
  %v506 = vsel %vm307, %v504, 0
  %508 = vmatprep.subr.mxu0 0.0
  %509 = vmatpush1.msra.mxu0 %v35
  %510 = vmatprep.subr.mxu0 0.0
  %511 = vmatpush1.msra.mxu0 %v36
  %512 = vmatprep.subr.mxu0 0.0
  %513 = vmatpush1.msra.mxu0 %v37
  %514 = vmatprep.subr.mxu0 0.0
  %515 = vmatpush1.msra.mxu0 %v38
  %516 = vmatprep.subr.mxu0 0.0
  %517 = vmatpush1.msra.mxu0 %v39
  %518 = vmatprep.subr.mxu0 0.0
  %519 = vmatpush1.msra.mxu0 %v40
  %520 = vmatprep.subr.mxu0 0.0
  %521 = vmatpush1.msra.mxu0 %v41
  %522 = vmatprep.subr.mxu0 0.0
  %523 = vmatpush1.msra.mxu0 %v42
  %524 = vmatprep.subr.mxu0 0.0
  %525 = vmatpush1.msra.mxu0 0.0
  %526 = vmatprep.subr.mxu0 0.0
  %527 = vmatpush1.msra.mxu0 0.0
  %528 = vmatprep.subr.mxu0 0.0
  %529 = vmatpush1.msra.mxu0 0.0
  %530 = vmatprep.subr.mxu0 0.0
  %531 = vmatpush1.msra.mxu0 0.0
  %532 = vmatprep.subr.mxu0 0.0
  %533 = vmatpush1.msra.mxu0 0.0
  %534 = vmatprep.subr.mxu0 0.0
  %535 = vmatpush1.msra.mxu0 0.0
  %536 = vmatprep.subr.mxu0 0.0
  %537 = vmatpush1.msra.mxu0 0.0
  %538 = vmatprep.subr.mxu0 0.0
  %539 = vmatpush1.msra.mxu0 0.0
  %540 = vmatprep.subr.mxu0 0.0
  %541 = vmatpush1.msra.mxu0 0.0
  %542 = vmatprep.subr.mxu0 0.0
  %543 = vmatpush1.msra.mxu0 0.0
  %544 = vmatprep.subr.mxu0 0.0
  %545 = vmatpush1.msra.mxu0 0.0
  %546 = vmatprep.subr.mxu0 0.0
  %547 = vmatpush1.msra.mxu0 0.0
  %548 = vmatprep.subr.mxu0 0.0
  %549 = vmatpush1.msra.mxu0 0.0
  %550 = vmatprep.subr.mxu0 0.0
  %551 = vmatpush1.msra.mxu0 0.0
  %552 = vmatprep.subr.mxu0 0.0
  %553 = vmatpush1.msra.mxu0 0.0
  %554 = vmatprep.subr.mxu0 0.0
  %555 = vmatpush1.msra.mxu0 0.0
  %556 = vmatprep.subr.mxu0 0.0
  %557 = vmatpush1.msra.mxu0 0.0
  %558 = vmatprep.subr.mxu0 0.0
  %559 = vmatpush1.msra.mxu0 0.0
  %560 = vmatprep.subr.mxu0 0.0
  %561 = vmatpush1.msra.mxu0 0.0
  %562 = vmatprep.subr.mxu0 0.0
  %563 = vmatpush1.msra.mxu0 0.0
  %564 = vmatprep.subr.mxu0 0.0
  %565 = vmatpush1.msra.mxu0 0.0
  %566 = vmatprep.subr.mxu0 0.0
  %567 = vmatpush1.msra.mxu0 0.0
  %568 = vmatprep.subr.mxu0 0.0
  %569 = vmatpush1.msra.mxu0 0.0
  %570 = vmatprep.subr.mxu0 0.0
  %571 = vmatpush1.msra.mxu0 0.0
  %572 = vmatprep.mubr.f32.mxu0 0.0
  %573 = vmatmul.mubr.f32.gmra.mrb[0].mxu0 %v506
  %v574 = vpop.f32.mrb[0].mxu0
  %v575 = vadd.f32 %v305, %v574
  %v576 = vpop.f32.mrb[0].mxu0
  %577 = vdwg.mxu0
  %v578 = vmul.f32 %v575, %v199
  %v579 = vtanh.pop %v578
  %v580 = vmul.f32 %v579, 0.5
  %v581 = vadd.f32 %v580, 0.5
  %v582 = vmul.f32 %v581, %v395
  %584 = vrot.lane.b32.xlu0 %v579, 64
  %v585 = vpop.permute.xlu0 %584
  %v587 = vmul.f32 %v581, %v585
  %589 = vrot.lane.b32.xlu0 %v587, 32
  %v590 = vpop.permute.xlu0 %589
  %v592 = vadd.f32 %v582, %v590
  %v593 = vtanh.pop %v592
  %595 = vrot.lane.b32.xlu0 %v593, 64
  %v596 = vpop.permute.xlu0 %595
  %v598 = vmul.f32 %v581, %v596
  %v599 = vsel %vm200, %v498, 0
  %601 = vmatprep.subr.mxu0 0.0
  %602 = vmatpush1.msra.mxu0 %v31
  %603 = vmatprep.subr.mxu0 0.0
  %604 = vmatpush1.msra.mxu0 %v32
  %605 = vmatprep.subr.mxu0 0.0
  %606 = vmatpush1.msra.mxu0 %v33
  %607 = vmatprep.subr.mxu0 0.0
  %608 = vmatpush1.msra.mxu0 %v34
  %609 = vmatprep.subr.mxu0 0.0
  %610 = vmatpush1.msra.mxu0 0.0
  %611 = vmatprep.subr.mxu0 0.0
  %612 = vmatpush1.msra.mxu0 0.0
  %613 = vmatprep.subr.mxu0 0.0
  %614 = vmatpush1.msra.mxu0 0.0
  %615 = vmatprep.subr.mxu0 0.0
  %616 = vmatpush1.msra.mxu0 0.0
  %617 = vmatprep.subr.mxu0 0.0
  %618 = vmatpush1.msra.mxu0 0.0
  %619 = vmatprep.subr.mxu0 0.0
  %620 = vmatpush1.msra.mxu0 0.0
  %621 = vmatprep.subr.mxu0 0.0
  %622 = vmatpush1.msra.mxu0 0.0
  %623 = vmatprep.subr.mxu0 0.0
  %624 = vmatpush1.msra.mxu0 0.0
  %625 = vmatprep.subr.mxu0 0.0
  %626 = vmatpush1.msra.mxu0 0.0
  %627 = vmatprep.subr.mxu0 0.0
  %628 = vmatpush1.msra.mxu0 0.0
  %629 = vmatprep.subr.mxu0 0.0
  %630 = vmatpush1.msra.mxu0 0.0
  %631 = vmatprep.subr.mxu0 0.0
  %632 = vmatpush1.msra.mxu0 0.0
  %633 = vmatprep.subr.mxu0 0.0
  %634 = vmatpush1.msra.mxu0 0.0
  %635 = vmatprep.subr.mxu0 0.0
  %636 = vmatpush1.msra.mxu0 0.0
  %637 = vmatprep.subr.mxu0 0.0
  %638 = vmatpush1.msra.mxu0 0.0
  %639 = vmatprep.subr.mxu0 0.0
  %640 = vmatpush1.msra.mxu0 0.0
  %641 = vmatprep.subr.mxu0 0.0
  %642 = vmatpush1.msra.mxu0 0.0
  %643 = vmatprep.subr.mxu0 0.0
  %644 = vmatpush1.msra.mxu0 0.0
  %645 = vmatprep.subr.mxu0 0.0
  %646 = vmatpush1.msra.mxu0 0.0
  %647 = vmatprep.subr.mxu0 0.0
  %648 = vmatpush1.msra.mxu0 0.0
  %649 = vmatprep.subr.mxu0 0.0
  %650 = vmatpush1.msra.mxu0 0.0
  %651 = vmatprep.subr.mxu0 0.0
  %652 = vmatpush1.msra.mxu0 0.0
  %653 = vmatprep.subr.mxu0 0.0
  %654 = vmatpush1.msra.mxu0 0.0
  %655 = vmatprep.subr.mxu0 0.0
  %656 = vmatpush1.msra.mxu0 0.0
  %657 = vmatprep.subr.mxu0 0.0
  %658 = vmatpush1.msra.mxu0 0.0
  %659 = vmatprep.subr.mxu0 0.0
  %660 = vmatpush1.msra.mxu0 0.0
  %661 = vmatprep.subr.mxu0 0.0
  %662 = vmatpush1.msra.mxu0 0.0
  %663 = vmatprep.subr.mxu0 0.0
  %664 = vmatpush1.msra.mxu0 0.0
  %665 = vmatprep.mubr.f32.mxu0 0.0
  %666 = vmatmul.mubr.f32.gmra.mrb[0].mxu0 %v599
  %v667 = vpop.f32.mrb[0].mxu0
  %v668 = vadd.f32 0.0, %v667
  %v669 = vpop.f32.mrb[0].mxu0
  %670 = vdwg.mxu0
  %v671 = vadd.f32 %v166, %v668
  %v672 = vmul.f32 %v671, %v199
  %v673 = vtanh.pop %v672
  %v674 = vmul.f32 %v673, 0.5
  %v675 = vadd.f32 %v674, 0.5
  %v676 = vmul.f32 %v675, %v489
  %678 = vrot.lane.b32.xlu0 %v673, 64
  %v679 = vpop.permute.xlu0 %678
  %v681 = vmul.f32 %v675, %v679
  %683 = vrot.lane.b32.xlu0 %v681, 32
  %v684 = vpop.permute.xlu0 %683
  %v686 = vadd.f32 %v676, %v684
  %v687 = vtanh.pop %v686
  %689 = vrot.lane.b32.xlu0 %v687, 64
  %v690 = vpop.permute.xlu0 %689
  %v692 = vmul.f32 %v675, %v690
  %694 = vrot.lane.b32.xlu0 %v692, 32
  %v695 = vpop.permute.xlu0 %694
  %698 = vrot.lane.b32.xlu0 %v598, 64
  %v699 = vpop.permute.xlu0 %698
  %v701 = vsel %vm200, %v695, %v699
  %v703 = vsel %vm307, %v701, 0
  %705 = vmatprep.subr.mxu0 0.0
  %706 = vmatpush1.msra.mxu0 %v35
  %707 = vmatprep.subr.mxu0 0.0
  %708 = vmatpush1.msra.mxu0 %v36
  %709 = vmatprep.subr.mxu0 0.0
  %710 = vmatpush1.msra.mxu0 %v37
  %711 = vmatprep.subr.mxu0 0.0
  %712 = vmatpush1.msra.mxu0 %v38
  %713 = vmatprep.subr.mxu0 0.0
  %714 = vmatpush1.msra.mxu0 %v39
  %715 = vmatprep.subr.mxu0 0.0
  %716 = vmatpush1.msra.mxu0 %v40
  %717 = vmatprep.subr.mxu0 0.0
  %718 = vmatpush1.msra.mxu0 %v41
  %719 = vmatprep.subr.mxu0 0.0
  %720 = vmatpush1.msra.mxu0 %v42
  %721 = vmatprep.subr.mxu0 0.0
  %722 = vmatpush1.msra.mxu0 0.0
  %723 = vmatprep.subr.mxu0 0.0
  %724 = vmatpush1.msra.mxu0 0.0
  %725 = vmatprep.subr.mxu0 0.0
  %726 = vmatpush1.msra.mxu0 0.0
  %727 = vmatprep.subr.mxu0 0.0
  %728 = vmatpush1.msra.mxu0 0.0
  %729 = vmatprep.subr.mxu0 0.0
  %730 = vmatpush1.msra.mxu0 0.0
  %731 = vmatprep.subr.mxu0 0.0
  %732 = vmatpush1.msra.mxu0 0.0
  %733 = vmatprep.subr.mxu0 0.0
  %734 = vmatpush1.msra.mxu0 0.0
  %735 = vmatprep.subr.mxu0 0.0
  %736 = vmatpush1.msra.mxu0 0.0
  %737 = vmatprep.subr.mxu0 0.0
  %738 = vmatpush1.msra.mxu0 0.0
  %739 = vmatprep.subr.mxu0 0.0
  %740 = vmatpush1.msra.mxu0 0.0
  %741 = vmatprep.subr.mxu0 0.0
  %742 = vmatpush1.msra.mxu0 0.0
  %743 = vmatprep.subr.mxu0 0.0
  %744 = vmatpush1.msra.mxu0 0.0
  %745 = vmatprep.subr.mxu0 0.0
  %746 = vmatpush1.msra.mxu0 0.0
  %747 = vmatprep.subr.mxu0 0.0
  %748 = vmatpush1.msra.mxu0 0.0
  %749 = vmatprep.subr.mxu0 0.0
  %750 = vmatpush1.msra.mxu0 0.0
  %751 = vmatprep.subr.mxu0 0.0
  %752 = vmatpush1.msra.mxu0 0.0
  %753 = vmatprep.subr.mxu0 0.0
  %754 = vmatpush1.msra.mxu0 0.0
  %755 = vmatprep.subr.mxu0 0.0
  %756 = vmatpush1.msra.mxu0 0.0
  %757 = vmatprep.subr.mxu0 0.0
  %758 = vmatpush1.msra.mxu0 0.0
  %759 = vmatprep.subr.mxu0 0.0
  %760 = vmatpush1.msra.mxu0 0.0
  %761 = vmatprep.subr.mxu0 0.0
  %762 = vmatpush1.msra.mxu0 0.0
  %763 = vmatprep.subr.mxu0 0.0
  %764 = vmatpush1.msra.mxu0 0.0
  %765 = vmatprep.subr.mxu0 0.0
  %766 = vmatpush1.msra.mxu0 0.0
  %767 = vmatprep.subr.mxu0 0.0
  %768 = vmatpush1.msra.mxu0 0.0
  %769 = vmatprep.mubr.f32.mxu0 0.0
  %770 = vmatmul.mubr.f32.gmra.mrb[0].mxu0 %v703
  %v771 = vpop.f32.mrb[0].mxu0
  %v772 = vadd.f32 %v305, %v771
  %v773 = vpop.f32.mrb[0].mxu0
  %774 = vdwg.mxu0
  %v775 = vmul.f32 %v772, %v199
  %v776 = vtanh.pop %v775
  %v777 = vmul.f32 %v776, 0.5
  %v778 = vadd.f32 %v777, 0.5
  %v779 = vmul.f32 %v778, %v592
  %781 = vrot.lane.b32.xlu0 %v776, 64
  %v782 = vpop.permute.xlu0 %781
  %v784 = vmul.f32 %v778, %v782
  %786 = vrot.lane.b32.xlu0 %v784, 32
  %v787 = vpop.permute.xlu0 %786
  %v789 = vadd.f32 %v779, %v787
  %v790 = vtanh.pop %v789
  %792 = vrot.lane.b32.xlu0 %v790, 64
  %v793 = vpop.permute.xlu0 %792
  %v795 = vmul.f32 %v778, %v793
  %v796 = vsel %vm200, %v695, 0
  %798 = vmatprep.subr.mxu0 0.0
  %799 = vmatpush1.msra.mxu0 %v31
  %800 = vmatprep.subr.mxu0 0.0
  %801 = vmatpush1.msra.mxu0 %v32
  %802 = vmatprep.subr.mxu0 0.0
  %803 = vmatpush1.msra.mxu0 %v33
  %804 = vmatprep.subr.mxu0 0.0
  %805 = vmatpush1.msra.mxu0 %v34
  %806 = vmatprep.subr.mxu0 0.0
  %807 = vmatpush1.msra.mxu0 0.0
  %808 = vmatprep.subr.mxu0 0.0
  %809 = vmatpush1.msra.mxu0 0.0
  %810 = vmatprep.subr.mxu0 0.0
  %811 = vmatpush1.msra.mxu0 0.0
  %812 = vmatprep.subr.mxu0 0.0
  %813 = vmatpush1.msra.mxu0 0.0
  %814 = vmatprep.subr.mxu0 0.0
  %815 = vmatpush1.msra.mxu0 0.0
  %816 = vmatprep.subr.mxu0 0.0
  %817 = vmatpush1.msra.mxu0 0.0
  %818 = vmatprep.subr.mxu0 0.0
  %819 = vmatpush1.msra.mxu0 0.0
  %820 = vmatprep.subr.mxu0 0.0
  %821 = vmatpush1.msra.mxu0 0.0
  %822 = vmatprep.subr.mxu0 0.0
  %823 = vmatpush1.msra.mxu0 0.0
  %824 = vmatprep.subr.mxu0 0.0
  %825 = vmatpush1.msra.mxu0 0.0
  %826 = vmatprep.subr.mxu0 0.0
  %827 = vmatpush1.msra.mxu0 0.0
  %828 = vmatprep.subr.mxu0 0.0
  %829 = vmatpush1.msra.mxu0 0.0
  %830 = vmatprep.subr.mxu0 0.0
  %831 = vmatpush1.msra.mxu0 0.0
  %832 = vmatprep.subr.mxu0 0.0
  %833 = vmatpush1.msra.mxu0 0.0
  %834 = vmatprep.subr.mxu0 0.0
  %835 = vmatpush1.msra.mxu0 0.0
  %836 = vmatprep.subr.mxu0 0.0
  %837 = vmatpush1.msra.mxu0 0.0
  %838 = vmatprep.subr.mxu0 0.0
  %839 = vmatpush1.msra.mxu0 0.0
  %840 = vmatprep.subr.mxu0 0.0
  %841 = vmatpush1.msra.mxu0 0.0
  %842 = vmatprep.subr.mxu0 0.0
  %843 = vmatpush1.msra.mxu0 0.0
  %844 = vmatprep.subr.mxu0 0.0
  %845 = vmatpush1.msra.mxu0 0.0
  %846 = vmatprep.subr.mxu0 0.0
  %847 = vmatpush1.msra.mxu0 0.0
  %848 = vmatprep.subr.mxu0 0.0
  %849 = vmatpush1.msra.mxu0 0.0
  %850 = vmatprep.subr.mxu0 0.0
  %851 = vmatpush1.msra.mxu0 0.0
  %852 = vmatprep.subr.mxu0 0.0
  %853 = vmatpush1.msra.mxu0 0.0
  %854 = vmatprep.subr.mxu0 0.0
  %855 = vmatpush1.msra.mxu0 0.0
  %856 = vmatprep.subr.mxu0 0.0
  %857 = vmatpush1.msra.mxu0 0.0
  %858 = vmatprep.subr.mxu0 0.0
  %859 = vmatpush1.msra.mxu0 0.0
  %860 = vmatprep.subr.mxu0 0.0
  %861 = vmatpush1.msra.mxu0 0.0
  %862 = vmatprep.mubr.f32.mxu0 0.0
  %863 = vmatmul.mubr.f32.gmra.mrb[0].mxu0 %v796
  %v864 = vpop.f32.mrb[0].mxu0
  %v865 = vadd.f32 0.0, %v864
  %v866 = vpop.f32.mrb[0].mxu0
  %867 = vdwg.mxu0
  %v868 = vadd.f32 %v171, %v865
  %v869 = vmul.f32 %v868, %v199
  %v870 = vtanh.pop %v869
  %v871 = vmul.f32 %v870, 0.5
  %v872 = vadd.f32 %v871, 0.5
  %v873 = vmul.f32 %v872, %v686
  %875 = vrot.lane.b32.xlu0 %v870, 64
  %v876 = vpop.permute.xlu0 %875
  %v878 = vmul.f32 %v872, %v876
  %880 = vrot.lane.b32.xlu0 %v878, 32
  %v881 = vpop.permute.xlu0 %880
  %v883 = vadd.f32 %v873, %v881
  %v884 = vtanh.pop %v883
  %886 = vrot.lane.b32.xlu0 %v884, 64
  %v887 = vpop.permute.xlu0 %886
  %v889 = vmul.f32 %v872, %v887
  %891 = vrot.lane.b32.xlu0 %v889, 32
  %v892 = vpop.permute.xlu0 %891
  %895 = vrot.lane.b32.xlu0 %v795, 64
  %v896 = vpop.permute.xlu0 %895
  %v898 = vsel %vm200, %v892, %v896
  %v900 = vsel %vm307, %v898, 0
  %902 = vmatprep.subr.mxu0 0.0
  %903 = vmatpush1.msra.mxu0 %v35
  %904 = vmatprep.subr.mxu0 0.0
  %905 = vmatpush1.msra.mxu0 %v36
  %906 = vmatprep.subr.mxu0 0.0
  %907 = vmatpush1.msra.mxu0 %v37
  %908 = vmatprep.subr.mxu0 0.0
  %909 = vmatpush1.msra.mxu0 %v38
  %910 = vmatprep.subr.mxu0 0.0
  %911 = vmatpush1.msra.mxu0 %v39
  %912 = vmatprep.subr.mxu0 0.0
  %913 = vmatpush1.msra.mxu0 %v40
  %914 = vmatprep.subr.mxu0 0.0
  %915 = vmatpush1.msra.mxu0 %v41
  %916 = vmatprep.subr.mxu0 0.0
  %917 = vmatpush1.msra.mxu0 %v42
  %918 = vmatprep.subr.mxu0 0.0
  %919 = vmatpush1.msra.mxu0 0.0
  %920 = vmatprep.subr.mxu0 0.0
  %921 = vmatpush1.msra.mxu0 0.0
  %922 = vmatprep.subr.mxu0 0.0
  %923 = vmatpush1.msra.mxu0 0.0
  %924 = vmatprep.subr.mxu0 0.0
  %925 = vmatpush1.msra.mxu0 0.0
  %926 = vmatprep.subr.mxu0 0.0
  %927 = vmatpush1.msra.mxu0 0.0
  %928 = vmatprep.subr.mxu0 0.0
  %929 = vmatpush1.msra.mxu0 0.0
  %930 = vmatprep.subr.mxu0 0.0
  %931 = vmatpush1.msra.mxu0 0.0
  %932 = vmatprep.subr.mxu0 0.0
  %933 = vmatpush1.msra.mxu0 0.0
  %934 = vmatprep.subr.mxu0 0.0
  %935 = vmatpush1.msra.mxu0 0.0
  %936 = vmatprep.subr.mxu0 0.0
  %937 = vmatpush1.msra.mxu0 0.0
  %938 = vmatprep.subr.mxu0 0.0
  %939 = vmatpush1.msra.mxu0 0.0
  %940 = vmatprep.subr.mxu0 0.0
  %941 = vmatpush1.msra.mxu0 0.0
  %942 = vmatprep.subr.mxu0 0.0
  %943 = vmatpush1.msra.mxu0 0.0
  %944 = vmatprep.subr.mxu0 0.0
  %945 = vmatpush1.msra.mxu0 0.0
  %946 = vmatprep.subr.mxu0 0.0
  %947 = vmatpush1.msra.mxu0 0.0
  %948 = vmatprep.subr.mxu0 0.0
  %949 = vmatpush1.msra.mxu0 0.0
  %950 = vmatprep.subr.mxu0 0.0
  %951 = vmatpush1.msra.mxu0 0.0
  %952 = vmatprep.subr.mxu0 0.0
  %953 = vmatpush1.msra.mxu0 0.0
  %954 = vmatprep.subr.mxu0 0.0
  %955 = vmatpush1.msra.mxu0 0.0
  %956 = vmatprep.subr.mxu0 0.0
  %957 = vmatpush1.msra.mxu0 0.0
  %958 = vmatprep.subr.mxu0 0.0
  %959 = vmatpush1.msra.mxu0 0.0
  %960 = vmatprep.subr.mxu0 0.0
  %961 = vmatpush1.msra.mxu0 0.0
  %962 = vmatprep.subr.mxu0 0.0
  %963 = vmatpush1.msra.mxu0 0.0
  %964 = vmatprep.subr.mxu0 0.0
  %965 = vmatpush1.msra.mxu0 0.0
  %966 = vmatprep.mubr.f32.mxu0 0.0
  %967 = vmatmul.mubr.f32.gmra.mrb[0].mxu0 %v900
  %v968 = vpop.f32.mrb[0].mxu0
  %v969 = vadd.f32 %v305, %v968
  %v970 = vpop.f32.mrb[0].mxu0
  %971 = vdwg.mxu0
  %v972 = vmul.f32 %v969, %v199
  %v973 = vtanh.pop %v972
  %v974 = vmul.f32 %v973, 0.5
  %v975 = vadd.f32 %v974, 0.5
  %v976 = vmul.f32 %v975, %v789
  %978 = vrot.lane.b32.xlu0 %v973, 64
  %v979 = vpop.permute.xlu0 %978
  %v981 = vmul.f32 %v975, %v979
  %983 = vrot.lane.b32.xlu0 %v981, 32
  %v984 = vpop.permute.xlu0 %983
  %v986 = vadd.f32 %v976, %v984
  %v987 = vtanh.pop %v986
  %989 = vrot.lane.b32.xlu0 %v987, 64
  %v990 = vpop.permute.xlu0 %989
  %v992 = vmul.f32 %v975, %v990
  %v993 = vsel %vm200, %v892, 0
  %995 = vmatprep.subr.mxu0 0.0
  %996 = vmatpush1.msra.mxu0 %v31
  %997 = vmatprep.subr.mxu0 0.0
  %998 = vmatpush1.msra.mxu0 %v32
  %999 = vmatprep.subr.mxu0 0.0
  %1000 = vmatpush1.msra.mxu0 %v33
  %1001 = vmatprep.subr.mxu0 0.0
  %1002 = vmatpush1.msra.mxu0 %v34
  %1003 = vmatprep.subr.mxu0 0.0
  %1004 = vmatpush1.msra.mxu0 0.0
  %1005 = vmatprep.subr.mxu0 0.0
  %1006 = vmatpush1.msra.mxu0 0.0
  %1007 = vmatprep.subr.mxu0 0.0
  %1008 = vmatpush1.msra.mxu0 0.0
  %1009 = vmatprep.subr.mxu0 0.0
  %1010 = vmatpush1.msra.mxu0 0.0
  %1011 = vmatprep.subr.mxu0 0.0
  %1012 = vmatpush1.msra.mxu0 0.0
  %1013 = vmatprep.subr.mxu0 0.0
  %1014 = vmatpush1.msra.mxu0 0.0
  %1015 = vmatprep.subr.mxu0 0.0
  %1016 = vmatpush1.msra.mxu0 0.0
  %1017 = vmatprep.subr.mxu0 0.0
  %1018 = vmatpush1.msra.mxu0 0.0
  %1019 = vmatprep.subr.mxu0 0.0
  %1020 = vmatpush1.msra.mxu0 0.0
  %1021 = vmatprep.subr.mxu0 0.0
  %1022 = vmatpush1.msra.mxu0 0.0
  %1023 = vmatprep.subr.mxu0 0.0
  %1024 = vmatpush1.msra.mxu0 0.0
  %1025 = vmatprep.subr.mxu0 0.0
  %1026 = vmatpush1.msra.mxu0 0.0
  %1027 = vmatprep.subr.mxu0 0.0
  %1028 = vmatpush1.msra.mxu0 0.0
  %1029 = vmatprep.subr.mxu0 0.0
  %1030 = vmatpush1.msra.mxu0 0.0
  %1031 = vmatprep.subr.mxu0 0.0
  %1032 = vmatpush1.msra.mxu0 0.0
  %1033 = vmatprep.subr.mxu0 0.0
  %1034 = vmatpush1.msra.mxu0 0.0
  %1035 = vmatprep.subr.mxu0 0.0
  %1036 = vmatpush1.msra.mxu0 0.0
  %1037 = vmatprep.subr.mxu0 0.0
  %1038 = vmatpush1.msra.mxu0 0.0
  %1039 = vmatprep.subr.mxu0 0.0
  %1040 = vmatpush1.msra.mxu0 0.0
  %1041 = vmatprep.subr.mxu0 0.0
  %1042 = vmatpush1.msra.mxu0 0.0
  %1043 = vmatprep.subr.mxu0 0.0
  %1044 = vmatpush1.msra.mxu0 0.0
  %1045 = vmatprep.subr.mxu0 0.0
  %1046 = vmatpush1.msra.mxu0 0.0
  %1047 = vmatprep.subr.mxu0 0.0
  %1048 = vmatpush1.msra.mxu0 0.0
  %1049 = vmatprep.subr.mxu0 0.0
  %1050 = vmatpush1.msra.mxu0 0.0
  %1051 = vmatprep.subr.mxu0 0.0
  %1052 = vmatpush1.msra.mxu0 0.0
  %1053 = vmatprep.subr.mxu0 0.0
  %1054 = vmatpush1.msra.mxu0 0.0
  %1055 = vmatprep.subr.mxu0 0.0
  %1056 = vmatpush1.msra.mxu0 0.0
  %1057 = vmatprep.subr.mxu0 0.0
  %1058 = vmatpush1.msra.mxu0 0.0
  %1059 = vmatprep.mubr.f32.mxu0 0.0
  %1060 = vmatmul.mubr.f32.gmra.mrb[0].mxu0 %v993
  %v1061 = vpop.f32.mrb[0].mxu0
  %v1062 = vadd.f32 0.0, %v1061
  %v1063 = vpop.f32.mrb[0].mxu0
  %1064 = vdwg.mxu0
  %v1065 = vadd.f32 %v176, %v1062
  %v1066 = vmul.f32 %v1065, %v199
  %v1067 = vtanh.pop %v1066
  %v1068 = vmul.f32 %v1067, 0.5
  %v1069 = vadd.f32 %v1068, 0.5
  %v1070 = vmul.f32 %v1069, %v883
  %1072 = vrot.lane.b32.xlu0 %v1067, 64
  %v1073 = vpop.permute.xlu0 %1072
  %v1075 = vmul.f32 %v1069, %v1073
  %1077 = vrot.lane.b32.xlu0 %v1075, 32
  %v1078 = vpop.permute.xlu0 %1077
  %v1080 = vadd.f32 %v1070, %v1078
  %v1081 = vtanh.pop %v1080
  %1083 = vrot.lane.b32.xlu0 %v1081, 64
  %v1084 = vpop.permute.xlu0 %1083
  %v1086 = vmul.f32 %v1069, %v1084
  %1088 = vrot.lane.b32.xlu0 %v1086, 32
  %v1089 = vpop.permute.xlu0 %1088
  %1092 = vrot.lane.b32.xlu0 %v992, 64
  %v1093 = vpop.permute.xlu0 %1092
  %v1095 = vsel %vm200, %v1089, %v1093
  %v1097 = vsel %vm307, %v1095, 0
  %1099 = vmatprep.subr.mxu0 0.0
  %1100 = vmatpush1.msra.mxu0 %v35
  %1101 = vmatprep.subr.mxu0 0.0
  %1102 = vmatpush1.msra.mxu0 %v36
  %1103 = vmatprep.subr.mxu0 0.0
  %1104 = vmatpush1.msra.mxu0 %v37
  %1105 = vmatprep.subr.mxu0 0.0
  %1106 = vmatpush1.msra.mxu0 %v38
  %1107 = vmatprep.subr.mxu0 0.0
  %1108 = vmatpush1.msra.mxu0 %v39
  %1109 = vmatprep.subr.mxu0 0.0
  %1110 = vmatpush1.msra.mxu0 %v40
  %1111 = vmatprep.subr.mxu0 0.0
  %1112 = vmatpush1.msra.mxu0 %v41
  %1113 = vmatprep.subr.mxu0 0.0
  %1114 = vmatpush1.msra.mxu0 %v42
  %1115 = vmatprep.subr.mxu0 0.0
  %1116 = vmatpush1.msra.mxu0 0.0
  %1117 = vmatprep.subr.mxu0 0.0
  %1118 = vmatpush1.msra.mxu0 0.0
  %1119 = vmatprep.subr.mxu0 0.0
  %1120 = vmatpush1.msra.mxu0 0.0
  %1121 = vmatprep.subr.mxu0 0.0
  %1122 = vmatpush1.msra.mxu0 0.0
  %1123 = vmatprep.subr.mxu0 0.0
  %1124 = vmatpush1.msra.mxu0 0.0
  %1125 = vmatprep.subr.mxu0 0.0
  %1126 = vmatpush1.msra.mxu0 0.0
  %1127 = vmatprep.subr.mxu0 0.0
  %1128 = vmatpush1.msra.mxu0 0.0
  %1129 = vmatprep.subr.mxu0 0.0
  %1130 = vmatpush1.msra.mxu0 0.0
  %1131 = vmatprep.subr.mxu0 0.0
  %1132 = vmatpush1.msra.mxu0 0.0
  %1133 = vmatprep.subr.mxu0 0.0
  %1134 = vmatpush1.msra.mxu0 0.0
  %1135 = vmatprep.subr.mxu0 0.0
  %1136 = vmatpush1.msra.mxu0 0.0
  %1137 = vmatprep.subr.mxu0 0.0
  %1138 = vmatpush1.msra.mxu0 0.0
  %1139 = vmatprep.subr.mxu0 0.0
  %1140 = vmatpush1.msra.mxu0 0.0
  %1141 = vmatprep.subr.mxu0 0.0
  %1142 = vmatpush1.msra.mxu0 0.0
  %1143 = vmatprep.subr.mxu0 0.0
  %1144 = vmatpush1.msra.mxu0 0.0
  %1145 = vmatprep.subr.mxu0 0.0
  %1146 = vmatpush1.msra.mxu0 0.0
  %1147 = vmatprep.subr.mxu0 0.0
  %1148 = vmatpush1.msra.mxu0 0.0
  %1149 = vmatprep.subr.mxu0 0.0
  %1150 = vmatpush1.msra.mxu0 0.0
  %1151 = vmatprep.subr.mxu0 0.0
  %1152 = vmatpush1.msra.mxu0 0.0
  %1153 = vmatprep.subr.mxu0 0.0
  %1154 = vmatpush1.msra.mxu0 0.0
  %1155 = vmatprep.subr.mxu0 0.0
  %1156 = vmatpush1.msra.mxu0 0.0
  %1157 = vmatprep.subr.mxu0 0.0
  %1158 = vmatpush1.msra.mxu0 0.0
  %1159 = vmatprep.subr.mxu0 0.0
  %1160 = vmatpush1.msra.mxu0 0.0
  %1161 = vmatprep.subr.mxu0 0.0
  %1162 = vmatpush1.msra.mxu0 0.0
  %1163 = vmatprep.mubr.f32.mxu0 0.0
  %1164 = vmatmul.mubr.f32.gmra.mrb[0].mxu0 %v1097
  %v1165 = vpop.f32.mrb[0].mxu0
  %v1166 = vadd.f32 %v305, %v1165
  %v1167 = vpop.f32.mrb[0].mxu0
  %1168 = vdwg.mxu0
  %v1169 = vmul.f32 %v1166, %v199
  %v1170 = vtanh.pop %v1169
  %v1171 = vmul.f32 %v1170, 0.5
  %v1172 = vadd.f32 %v1171, 0.5
  %v1173 = vmul.f32 %v1172, %v986
  %1175 = vrot.lane.b32.xlu0 %v1170, 64
  %v1176 = vpop.permute.xlu0 %1175
  %v1178 = vmul.f32 %v1172, %v1176
  %1180 = vrot.lane.b32.xlu0 %v1178, 32
  %v1181 = vpop.permute.xlu0 %1180
  %v1183 = vadd.f32 %v1173, %v1181
  %v1184 = vtanh.pop %v1183
  %1186 = vrot.lane.b32.xlu0 %v1184, 64
  %v1187 = vpop.permute.xlu0 %1186
  %v1189 = vmul.f32 %v1172, %v1187
  %v1190 = vsel %vm200, %v1089, 0
  %1192 = vmatprep.subr.mxu0 0.0
  %1193 = vmatpush1.msra.mxu0 %v31
  %1194 = vmatprep.subr.mxu0 0.0
  %1195 = vmatpush1.msra.mxu0 %v32
  %1196 = vmatprep.subr.mxu0 0.0
  %1197 = vmatpush1.msra.mxu0 %v33
  %1198 = vmatprep.subr.mxu0 0.0
  %1199 = vmatpush1.msra.mxu0 %v34
  %1200 = vmatprep.subr.mxu0 0.0
  %1201 = vmatpush1.msra.mxu0 0.0
  %1202 = vmatprep.subr.mxu0 0.0
  %1203 = vmatpush1.msra.mxu0 0.0
  %1204 = vmatprep.subr.mxu0 0.0
  %1205 = vmatpush1.msra.mxu0 0.0
  %1206 = vmatprep.subr.mxu0 0.0
  %1207 = vmatpush1.msra.mxu0 0.0
  %1208 = vmatprep.subr.mxu0 0.0
  %1209 = vmatpush1.msra.mxu0 0.0
  %1210 = vmatprep.subr.mxu0 0.0
  %1211 = vmatpush1.msra.mxu0 0.0
  %1212 = vmatprep.subr.mxu0 0.0
  %1213 = vmatpush1.msra.mxu0 0.0
  %1214 = vmatprep.subr.mxu0 0.0
  %1215 = vmatpush1.msra.mxu0 0.0
  %1216 = vmatprep.subr.mxu0 0.0
  %1217 = vmatpush1.msra.mxu0 0.0
  %1218 = vmatprep.subr.mxu0 0.0
  %1219 = vmatpush1.msra.mxu0 0.0
  %1220 = vmatprep.subr.mxu0 0.0
  %1221 = vmatpush1.msra.mxu0 0.0
  %1222 = vmatprep.subr.mxu0 0.0
  %1223 = vmatpush1.msra.mxu0 0.0
  %1224 = vmatprep.subr.mxu0 0.0
  %1225 = vmatpush1.msra.mxu0 0.0
  %1226 = vmatprep.subr.mxu0 0.0
  %1227 = vmatpush1.msra.mxu0 0.0
  %1228 = vmatprep.subr.mxu0 0.0
  %1229 = vmatpush1.msra.mxu0 0.0
  %1230 = vmatprep.subr.mxu0 0.0
  %1231 = vmatpush1.msra.mxu0 0.0
  %1232 = vmatprep.subr.mxu0 0.0
  %1233 = vmatpush1.msra.mxu0 0.0
  %1234 = vmatprep.subr.mxu0 0.0
  %1235 = vmatpush1.msra.mxu0 0.0
  %1236 = vmatprep.subr.mxu0 0.0
  %1237 = vmatpush1.msra.mxu0 0.0
  %1238 = vmatprep.subr.mxu0 0.0
  %1239 = vmatpush1.msra.mxu0 0.0
  %1240 = vmatprep.subr.mxu0 0.0
  %1241 = vmatpush1.msra.mxu0 0.0
  %1242 = vmatprep.subr.mxu0 0.0
  %1243 = vmatpush1.msra.mxu0 0.0
  %1244 = vmatprep.subr.mxu0 0.0
  %1245 = vmatpush1.msra.mxu0 0.0
  %1246 = vmatprep.subr.mxu0 0.0
  %1247 = vmatpush1.msra.mxu0 0.0
  %1248 = vmatprep.subr.mxu0 0.0
  %1249 = vmatpush1.msra.mxu0 0.0
  %1250 = vmatprep.subr.mxu0 0.0
  %1251 = vmatpush1.msra.mxu0 0.0
  %1252 = vmatprep.subr.mxu0 0.0
  %1253 = vmatpush1.msra.mxu0 0.0
  %1254 = vmatprep.subr.mxu0 0.0
  %1255 = vmatpush1.msra.mxu0 0.0
  %1256 = vmatprep.mubr.f32.mxu0 0.0
  %1257 = vmatmul.mubr.f32.gmra.mrb[0].mxu0 %v1190
  %v1258 = vpop.f32.mrb[0].mxu0
  %v1259 = vadd.f32 0.0, %v1258
  %v1260 = vpop.f32.mrb[0].mxu0
  %1261 = vdwg.mxu0
  %v1262 = vadd.f32 %v181, %v1259
  %v1263 = vmul.f32 %v1262, %v199
  %v1264 = vtanh.pop %v1263
  %v1265 = vmul.f32 %v1264, 0.5
  %v1266 = vadd.f32 %v1265, 0.5
  %v1267 = vmul.f32 %v1266, %v1080
  %1269 = vrot.lane.b32.xlu0 %v1264, 64
  %v1270 = vpop.permute.xlu0 %1269
  %v1272 = vmul.f32 %v1266, %v1270
  %1274 = vrot.lane.b32.xlu0 %v1272, 32
  %v1275 = vpop.permute.xlu0 %1274
  %v1277 = vadd.f32 %v1267, %v1275
  %v1278 = vtanh.pop %v1277
  %1280 = vrot.lane.b32.xlu0 %v1278, 64
  %v1281 = vpop.permute.xlu0 %1280
  %v1283 = vmul.f32 %v1266, %v1281
  %1285 = vrot.lane.b32.xlu0 %v1283, 32
  %v1286 = vpop.permute.xlu0 %1285
  %1289 = vrot.lane.b32.xlu0 %v1189, 64
  %v1290 = vpop.permute.xlu0 %1289
  %v1292 = vsel %vm200, %v1286, %v1290
  %v1294 = vsel %vm307, %v1292, 0
  %1296 = vmatprep.subr.mxu0 0.0
  %1297 = vmatpush1.msra.mxu0 %v35
  %1298 = vmatprep.subr.mxu0 0.0
  %1299 = vmatpush1.msra.mxu0 %v36
  %1300 = vmatprep.subr.mxu0 0.0
  %1301 = vmatpush1.msra.mxu0 %v37
  %1302 = vmatprep.subr.mxu0 0.0
  %1303 = vmatpush1.msra.mxu0 %v38
  %1304 = vmatprep.subr.mxu0 0.0
  %1305 = vmatpush1.msra.mxu0 %v39
  %1306 = vmatprep.subr.mxu0 0.0
  %1307 = vmatpush1.msra.mxu0 %v40
  %1308 = vmatprep.subr.mxu0 0.0
  %1309 = vmatpush1.msra.mxu0 %v41
  %1310 = vmatprep.subr.mxu0 0.0
  %1311 = vmatpush1.msra.mxu0 %v42
  %1312 = vmatprep.subr.mxu0 0.0
  %1313 = vmatpush1.msra.mxu0 0.0
  %1314 = vmatprep.subr.mxu0 0.0
  %1315 = vmatpush1.msra.mxu0 0.0
  %1316 = vmatprep.subr.mxu0 0.0
  %1317 = vmatpush1.msra.mxu0 0.0
  %1318 = vmatprep.subr.mxu0 0.0
  %1319 = vmatpush1.msra.mxu0 0.0
  %1320 = vmatprep.subr.mxu0 0.0
  %1321 = vmatpush1.msra.mxu0 0.0
  %1322 = vmatprep.subr.mxu0 0.0
  %1323 = vmatpush1.msra.mxu0 0.0
  %1324 = vmatprep.subr.mxu0 0.0
  %1325 = vmatpush1.msra.mxu0 0.0
  %1326 = vmatprep.subr.mxu0 0.0
  %1327 = vmatpush1.msra.mxu0 0.0
  %1328 = vmatprep.subr.mxu0 0.0
  %1329 = vmatpush1.msra.mxu0 0.0
  %1330 = vmatprep.subr.mxu0 0.0
  %1331 = vmatpush1.msra.mxu0 0.0
  %1332 = vmatprep.subr.mxu0 0.0
  %1333 = vmatpush1.msra.mxu0 0.0
  %1334 = vmatprep.subr.mxu0 0.0
  %1335 = vmatpush1.msra.mxu0 0.0
  %1336 = vmatprep.subr.mxu0 0.0
  %1337 = vmatpush1.msra.mxu0 0.0
  %1338 = vmatprep.subr.mxu0 0.0
  %1339 = vmatpush1.msra.mxu0 0.0
  %1340 = vmatprep.subr.mxu0 0.0
  %1341 = vmatpush1.msra.mxu0 0.0
  %1342 = vmatprep.subr.mxu0 0.0
  %1343 = vmatpush1.msra.mxu0 0.0
  %1344 = vmatprep.subr.mxu0 0.0
  %1345 = vmatpush1.msra.mxu0 0.0
  %1346 = vmatprep.subr.mxu0 0.0
  %1347 = vmatpush1.msra.mxu0 0.0
  %1348 = vmatprep.subr.mxu0 0.0
  %1349 = vmatpush1.msra.mxu0 0.0
  %1350 = vmatprep.subr.mxu0 0.0
  %1351 = vmatpush1.msra.mxu0 0.0
  %1352 = vmatprep.subr.mxu0 0.0
  %1353 = vmatpush1.msra.mxu0 0.0
  %1354 = vmatprep.subr.mxu0 0.0
  %1355 = vmatpush1.msra.mxu0 0.0
  %1356 = vmatprep.subr.mxu0 0.0
  %1357 = vmatpush1.msra.mxu0 0.0
  %1358 = vmatprep.subr.mxu0 0.0
  %1359 = vmatpush1.msra.mxu0 0.0
  %1360 = vmatprep.mubr.f32.mxu0 0.0
  %1361 = vmatmul.mubr.f32.gmra.mrb[0].mxu0 %v1294
  %v1362 = vpop.f32.mrb[0].mxu0
  %v1363 = vadd.f32 %v305, %v1362
  %v1364 = vpop.f32.mrb[0].mxu0
  %1365 = vdwg.mxu0
  %v1366 = vmul.f32 %v1363, %v199
  %v1367 = vtanh.pop %v1366
  %v1368 = vmul.f32 %v1367, 0.5
  %v1369 = vadd.f32 %v1368, 0.5
  %v1370 = vmul.f32 %v1369, %v1183
  %1372 = vrot.lane.b32.xlu0 %v1367, 64
  %v1373 = vpop.permute.xlu0 %1372
  %v1375 = vmul.f32 %v1369, %v1373
  %1377 = vrot.lane.b32.xlu0 %v1375, 32
  %v1378 = vpop.permute.xlu0 %1377
  %v1380 = vadd.f32 %v1370, %v1378
  %v1381 = vtanh.pop %v1380
  %1383 = vrot.lane.b32.xlu0 %v1381, 64
  %v1384 = vpop.permute.xlu0 %1383
  %v1386 = vmul.f32 %v1369, %v1384
  %v1387 = vsel %vm200, %v1286, 0
  %1389 = vmatprep.subr.mxu0 0.0
  %1390 = vmatpush1.msra.mxu0 %v31
  %1391 = vmatprep.subr.mxu0 0.0
  %1392 = vmatpush1.msra.mxu0 %v32
  %1393 = vmatprep.subr.mxu0 0.0
  %1394 = vmatpush1.msra.mxu0 %v33
  %1395 = vmatprep.subr.mxu0 0.0
  %1396 = vmatpush1.msra.mxu0 %v34
  %1397 = vmatprep.subr.mxu0 0.0
  %1398 = vmatpush1.msra.mxu0 0.0
  %1399 = vmatprep.subr.mxu0 0.0
  %1400 = vmatpush1.msra.mxu0 0.0
  %1401 = vmatprep.subr.mxu0 0.0
  %1402 = vmatpush1.msra.mxu0 0.0
  %1403 = vmatprep.subr.mxu0 0.0
  %1404 = vmatpush1.msra.mxu0 0.0
  %1405 = vmatprep.subr.mxu0 0.0
  %1406 = vmatpush1.msra.mxu0 0.0
  %1407 = vmatprep.subr.mxu0 0.0
  %1408 = vmatpush1.msra.mxu0 0.0
  %1409 = vmatprep.subr.mxu0 0.0
  %1410 = vmatpush1.msra.mxu0 0.0
  %1411 = vmatprep.subr.mxu0 0.0
  %1412 = vmatpush1.msra.mxu0 0.0
  %1413 = vmatprep.subr.mxu0 0.0
  %1414 = vmatpush1.msra.mxu0 0.0
  %1415 = vmatprep.subr.mxu0 0.0
  %1416 = vmatpush1.msra.mxu0 0.0
  %1417 = vmatprep.subr.mxu0 0.0
  %1418 = vmatpush1.msra.mxu0 0.0
  %1419 = vmatprep.subr.mxu0 0.0
  %1420 = vmatpush1.msra.mxu0 0.0
  %1421 = vmatprep.subr.mxu0 0.0
  %1422 = vmatpush1.msra.mxu0 0.0
  %1423 = vmatprep.subr.mxu0 0.0
  %1424 = vmatpush1.msra.mxu0 0.0
  %1425 = vmatprep.subr.mxu0 0.0
  %1426 = vmatpush1.msra.mxu0 0.0
  %1427 = vmatprep.subr.mxu0 0.0
  %1428 = vmatpush1.msra.mxu0 0.0
  %1429 = vmatprep.subr.mxu0 0.0
  %1430 = vmatpush1.msra.mxu0 0.0
  %1431 = vmatprep.subr.mxu0 0.0
  %1432 = vmatpush1.msra.mxu0 0.0
  %1433 = vmatprep.subr.mxu0 0.0
  %1434 = vmatpush1.msra.mxu0 0.0
  %1435 = vmatprep.subr.mxu0 0.0
  %1436 = vmatpush1.msra.mxu0 0.0
  %1437 = vmatprep.subr.mxu0 0.0
  %1438 = vmatpush1.msra.mxu0 0.0
  %1439 = vmatprep.subr.mxu0 0.0
  %1440 = vmatpush1.msra.mxu0 0.0
  %1441 = vmatprep.subr.mxu0 0.0
  %1442 = vmatpush1.msra.mxu0 0.0
  %1443 = vmatprep.subr.mxu0 0.0
  %1444 = vmatpush1.msra.mxu0 0.0
  %1445 = vmatprep.subr.mxu0 0.0
  %1446 = vmatpush1.msra.mxu0 0.0
  %1447 = vmatprep.subr.mxu0 0.0
  %1448 = vmatpush1.msra.mxu0 0.0
  %1449 = vmatprep.subr.mxu0 0.0
  %1450 = vmatpush1.msra.mxu0 0.0
  %1451 = vmatprep.subr.mxu0 0.0
  %1452 = vmatpush1.msra.mxu0 0.0
  %1453 = vmatprep.mubr.f32.mxu0 0.0
  %1454 = vmatmul.mubr.f32.gmra.mrb[0].mxu0 %v1387
  %v1455 = vpop.f32.mrb[0].mxu0
  %v1456 = vadd.f32 0.0, %v1455
  %v1457 = vpop.f32.mrb[0].mxu0
  %1458 = vdwg.mxu0
  %v1459 = vadd.f32 %v186, %v1456
  %v1460 = vmul.f32 %v1459, %v199
  %v1461 = vtanh.pop %v1460
  %v1462 = vmul.f32 %v1461, 0.5
  %v1463 = vadd.f32 %v1462, 0.5
  %v1464 = vmul.f32 %v1463, %v1277
  %1466 = vrot.lane.b32.xlu0 %v1461, 64
  %v1467 = vpop.permute.xlu0 %1466
  %v1469 = vmul.f32 %v1463, %v1467
  %1471 = vrot.lane.b32.xlu0 %v1469, 32
  %v1472 = vpop.permute.xlu0 %1471
  %v1474 = vadd.f32 %v1464, %v1472
  %v1475 = vtanh.pop %v1474
  %1477 = vrot.lane.b32.xlu0 %v1475, 64
  %v1478 = vpop.permute.xlu0 %1477
  %v1480 = vmul.f32 %v1463, %v1478
  %1482 = vrot.lane.b32.xlu0 %v1480, 32
  %v1483 = vpop.permute.xlu0 %1482
  %1486 = vrot.lane.b32.xlu0 %v1386, 64
  %v1487 = vpop.permute.xlu0 %1486
  %v1489 = vsel %vm200, %v1483, %v1487
  %v1491 = vsel %vm307, %v1489, 0
  %1493 = vmatprep.subr.mxu0 0.0
  %1494 = vmatpush1.msra.mxu0 %v35
  %1495 = vmatprep.subr.mxu0 0.0
  %1496 = vmatpush1.msra.mxu0 %v36
  %1497 = vmatprep.subr.mxu0 0.0
  %1498 = vmatpush1.msra.mxu0 %v37
  %1499 = vmatprep.subr.mxu0 0.0
  %1500 = vmatpush1.msra.mxu0 %v38
  %1501 = vmatprep.subr.mxu0 0.0
  %1502 = vmatpush1.msra.mxu0 %v39
  %1503 = vmatprep.subr.mxu0 0.0
  %1504 = vmatpush1.msra.mxu0 %v40
  %1505 = vmatprep.subr.mxu0 0.0
  %1506 = vmatpush1.msra.mxu0 %v41
  %1507 = vmatprep.subr.mxu0 0.0
  %1508 = vmatpush1.msra.mxu0 %v42
  %1509 = vmatprep.subr.mxu0 0.0
  %1510 = vmatpush1.msra.mxu0 0.0
  %1511 = vmatprep.subr.mxu0 0.0
  %1512 = vmatpush1.msra.mxu0 0.0
  %1513 = vmatprep.subr.mxu0 0.0
  %1514 = vmatpush1.msra.mxu0 0.0
  %1515 = vmatprep.subr.mxu0 0.0
  %1516 = vmatpush1.msra.mxu0 0.0
  %1517 = vmatprep.subr.mxu0 0.0
  %1518 = vmatpush1.msra.mxu0 0.0
  %1519 = vmatprep.subr.mxu0 0.0
  %1520 = vmatpush1.msra.mxu0 0.0
  %1521 = vmatprep.subr.mxu0 0.0
  %1522 = vmatpush1.msra.mxu0 0.0
  %1523 = vmatprep.subr.mxu0 0.0
  %1524 = vmatpush1.msra.mxu0 0.0
  %1525 = vmatprep.subr.mxu0 0.0
  %1526 = vmatpush1.msra.mxu0 0.0
  %1527 = vmatprep.subr.mxu0 0.0
  %1528 = vmatpush1.msra.mxu0 0.0
  %1529 = vmatprep.subr.mxu0 0.0
  %1530 = vmatpush1.msra.mxu0 0.0
  %1531 = vmatprep.subr.mxu0 0.0
  %1532 = vmatpush1.msra.mxu0 0.0
  %1533 = vmatprep.subr.mxu0 0.0
  %1534 = vmatpush1.msra.mxu0 0.0
  %1535 = vmatprep.subr.mxu0 0.0
  %1536 = vmatpush1.msra.mxu0 0.0
  %1537 = vmatprep.subr.mxu0 0.0
  %1538 = vmatpush1.msra.mxu0 0.0
  %1539 = vmatprep.subr.mxu0 0.0
  %1540 = vmatpush1.msra.mxu0 0.0
  %1541 = vmatprep.subr.mxu0 0.0
  %1542 = vmatpush1.msra.mxu0 0.0
  %1543 = vmatprep.subr.mxu0 0.0
  %1544 = vmatpush1.msra.mxu0 0.0
  %1545 = vmatprep.subr.mxu0 0.0
  %1546 = vmatpush1.msra.mxu0 0.0
  %1547 = vmatprep.subr.mxu0 0.0
  %1548 = vmatpush1.msra.mxu0 0.0
  %1549 = vmatprep.subr.mxu0 0.0
  %1550 = vmatpush1.msra.mxu0 0.0
  %1551 = vmatprep.subr.mxu0 0.0
  %1552 = vmatpush1.msra.mxu0 0.0
  %1553 = vmatprep.subr.mxu0 0.0
  %1554 = vmatpush1.msra.mxu0 0.0
  %1555 = vmatprep.subr.mxu0 0.0
  %1556 = vmatpush1.msra.mxu0 0.0
  %1557 = vmatprep.mubr.f32.mxu0 0.0
  %1558 = vmatmul.mubr.f32.gmra.mrb[0].mxu0 %v1491
  %v1559 = vpop.f32.mrb[0].mxu0
  %v1560 = vadd.f32 %v305, %v1559
  %v1561 = vpop.f32.mrb[0].mxu0
  %1562 = vdwg.mxu0
  %v1563 = vmul.f32 %v1560, %v199
  %v1564 = vtanh.pop %v1563
  %v1565 = vmul.f32 %v1564, 0.5
  %v1566 = vadd.f32 %v1565, 0.5
  %v1567 = vmul.f32 %v1566, %v1380
  %1569 = vrot.lane.b32.xlu0 %v1564, 64
  %v1570 = vpop.permute.xlu0 %1569
  %v1572 = vmul.f32 %v1566, %v1570
  %1574 = vrot.lane.b32.xlu0 %v1572, 32
  %v1575 = vpop.permute.xlu0 %1574
  %v1577 = vadd.f32 %v1567, %v1575
  %v1578 = vtanh.pop %v1577
  %1580 = vrot.lane.b32.xlu0 %v1578, 64
  %v1581 = vpop.permute.xlu0 %1580
  %v1583 = vmul.f32 %v1566, %v1581
  %v1584 = vsel %vm200, %v1483, 0
  %1586 = vmatprep.subr.mxu0 0.0
  %1587 = vmatpush1.msra.mxu0 %v31
  %1588 = vmatprep.subr.mxu0 0.0
  %1589 = vmatpush1.msra.mxu0 %v32
  %1590 = vmatprep.subr.mxu0 0.0
  %1591 = vmatpush1.msra.mxu0 %v33
  %1592 = vmatprep.subr.mxu0 0.0
  %1593 = vmatpush1.msra.mxu0 %v34
  %1594 = vmatprep.subr.mxu0 0.0
  %1595 = vmatpush1.msra.mxu0 0.0
  %1596 = vmatprep.subr.mxu0 0.0
  %1597 = vmatpush1.msra.mxu0 0.0
  %1598 = vmatprep.subr.mxu0 0.0
  %1599 = vmatpush1.msra.mxu0 0.0
  %1600 = vmatprep.subr.mxu0 0.0
  %1601 = vmatpush1.msra.mxu0 0.0
  %1602 = vmatprep.subr.mxu0 0.0
  %1603 = vmatpush1.msra.mxu0 0.0
  %1604 = vmatprep.subr.mxu0 0.0
  %1605 = vmatpush1.msra.mxu0 0.0
  %1606 = vmatprep.subr.mxu0 0.0
  %1607 = vmatpush1.msra.mxu0 0.0
  %1608 = vmatprep.subr.mxu0 0.0
  %1609 = vmatpush1.msra.mxu0 0.0
  %1610 = vmatprep.subr.mxu0 0.0
  %1611 = vmatpush1.msra.mxu0 0.0
  %1612 = vmatprep.subr.mxu0 0.0
  %1613 = vmatpush1.msra.mxu0 0.0
  %1614 = vmatprep.subr.mxu0 0.0
  %1615 = vmatpush1.msra.mxu0 0.0
  %1616 = vmatprep.subr.mxu0 0.0
  %1617 = vmatpush1.msra.mxu0 0.0
  %1618 = vmatprep.subr.mxu0 0.0
  %1619 = vmatpush1.msra.mxu0 0.0
  %1620 = vmatprep.subr.mxu0 0.0
  %1621 = vmatpush1.msra.mxu0 0.0
  %1622 = vmatprep.subr.mxu0 0.0
  %1623 = vmatpush1.msra.mxu0 0.0
  %1624 = vmatprep.subr.mxu0 0.0
  %1625 = vmatpush1.msra.mxu0 0.0
  %1626 = vmatprep.subr.mxu0 0.0
  %1627 = vmatpush1.msra.mxu0 0.0
  %1628 = vmatprep.subr.mxu0 0.0
  %1629 = vmatpush1.msra.mxu0 0.0
  %1630 = vmatprep.subr.mxu0 0.0
  %1631 = vmatpush1.msra.mxu0 0.0
  %1632 = vmatprep.subr.mxu0 0.0
  %1633 = vmatpush1.msra.mxu0 0.0
  %1634 = vmatprep.subr.mxu0 0.0
  %1635 = vmatpush1.msra.mxu0 0.0
  %1636 = vmatprep.subr.mxu0 0.0
  %1637 = vmatpush1.msra.mxu0 0.0
  %1638 = vmatprep.subr.mxu0 0.0
  %1639 = vmatpush1.msra.mxu0 0.0
  %1640 = vmatprep.subr.mxu0 0.0
  %1641 = vmatpush1.msra.mxu0 0.0
  %1642 = vmatprep.subr.mxu0 0.0
  %1643 = vmatpush1.msra.mxu0 0.0
  %1644 = vmatprep.subr.mxu0 0.0
  %1645 = vmatpush1.msra.mxu0 0.0
  %1646 = vmatprep.subr.mxu0 0.0
  %1647 = vmatpush1.msra.mxu0 0.0
  %1648 = vmatprep.subr.mxu0 0.0
  %1649 = vmatpush1.msra.mxu0 0.0
  %1650 = vmatprep.mubr.f32.mxu0 0.0
  %1651 = vmatmul.mubr.f32.gmra.mrb[0].mxu0 %v1584
  %v1652 = vpop.f32.mrb[0].mxu0
  %v1653 = vadd.f32 0.0, %v1652
  %v1654 = vpop.f32.mrb[0].mxu0
  %1655 = vdwg.mxu0
  %v1656 = vadd.f32 %v191, %v1653
  %v1657 = vmul.f32 %v1656, %v199
  %v1658 = vtanh.pop %v1657
  %v1659 = vmul.f32 %v1658, 0.5
  %v1660 = vadd.f32 %v1659, 0.5
  %v1661 = vmul.f32 %v1660, %v1474
  %1663 = vrot.lane.b32.xlu0 %v1658, 64
  %v1664 = vpop.permute.xlu0 %1663
  %v1666 = vmul.f32 %v1660, %v1664
  %1668 = vrot.lane.b32.xlu0 %v1666, 32
  %v1669 = vpop.permute.xlu0 %1668
  %v1671 = vadd.f32 %v1661, %v1669
  %v1672 = vtanh.pop %v1671
  %1674 = vrot.lane.b32.xlu0 %v1672, 64
  %v1675 = vpop.permute.xlu0 %1674
  %v1677 = vmul.f32 %v1660, %v1675
  %1679 = vrot.lane.b32.xlu0 %v1677, 32
  %v1680 = vpop.permute.xlu0 %1679
  %1683 = vrot.lane.b32.xlu0 %v1583, 64
  %v1684 = vpop.permute.xlu0 %1683
  %v1686 = vsel %vm200, %v1680, %v1684
  %v1688 = vsel %vm307, %v1686, 0
  %1690 = vmatprep.subr.mxu0 0.0
  %1691 = vmatpush1.msra.mxu0 %v35
  %1692 = vmatprep.subr.mxu0 0.0
  %1693 = vmatpush1.msra.mxu0 %v36
  %1694 = vmatprep.subr.mxu0 0.0
  %1695 = vmatpush1.msra.mxu0 %v37
  %1696 = vmatprep.subr.mxu0 0.0
  %1697 = vmatpush1.msra.mxu0 %v38
  %1698 = vmatprep.subr.mxu0 0.0
  %1699 = vmatpush1.msra.mxu0 %v39
  %1700 = vmatprep.subr.mxu0 0.0
  %1701 = vmatpush1.msra.mxu0 %v40
  %1702 = vmatprep.subr.mxu0 0.0
  %1703 = vmatpush1.msra.mxu0 %v41
  %1704 = vmatprep.subr.mxu0 0.0
  %1705 = vmatpush1.msra.mxu0 %v42
  %1706 = vmatprep.subr.mxu0 0.0
  %1707 = vmatpush1.msra.mxu0 0.0
  %1708 = vmatprep.subr.mxu0 0.0
  %1709 = vmatpush1.msra.mxu0 0.0
  %1710 = vmatprep.subr.mxu0 0.0
  %1711 = vmatpush1.msra.mxu0 0.0
  %1712 = vmatprep.subr.mxu0 0.0
  %1713 = vmatpush1.msra.mxu0 0.0
  %1714 = vmatprep.subr.mxu0 0.0
  %1715 = vmatpush1.msra.mxu0 0.0
  %1716 = vmatprep.subr.mxu0 0.0
  %1717 = vmatpush1.msra.mxu0 0.0
  %1718 = vmatprep.subr.mxu0 0.0
  %1719 = vmatpush1.msra.mxu0 0.0
  %1720 = vmatprep.subr.mxu0 0.0
  %1721 = vmatpush1.msra.mxu0 0.0
  %1722 = vmatprep.subr.mxu0 0.0
  %1723 = vmatpush1.msra.mxu0 0.0
  %1724 = vmatprep.subr.mxu0 0.0
  %1725 = vmatpush1.msra.mxu0 0.0
  %1726 = vmatprep.subr.mxu0 0.0
  %1727 = vmatpush1.msra.mxu0 0.0
  %1728 = vmatprep.subr.mxu0 0.0
  %1729 = vmatpush1.msra.mxu0 0.0
  %1730 = vmatprep.subr.mxu0 0.0
  %1731 = vmatpush1.msra.mxu0 0.0
  %1732 = vmatprep.subr.mxu0 0.0
  %1733 = vmatpush1.msra.mxu0 0.0
  %1734 = vmatprep.subr.mxu0 0.0
  %1735 = vmatpush1.msra.mxu0 0.0
  %1736 = vmatprep.subr.mxu0 0.0
  %1737 = vmatpush1.msra.mxu0 0.0
  %1738 = vmatprep.subr.mxu0 0.0
  %1739 = vmatpush1.msra.mxu0 0.0
  %1740 = vmatprep.subr.mxu0 0.0
  %1741 = vmatpush1.msra.mxu0 0.0
  %1742 = vmatprep.subr.mxu0 0.0
  %1743 = vmatpush1.msra.mxu0 0.0
  %1744 = vmatprep.subr.mxu0 0.0
  %1745 = vmatpush1.msra.mxu0 0.0
  %1746 = vmatprep.subr.mxu0 0.0
  %1747 = vmatpush1.msra.mxu0 0.0
  %1748 = vmatprep.subr.mxu0 0.0
  %1749 = vmatpush1.msra.mxu0 0.0
  %1750 = vmatprep.subr.mxu0 0.0
  %1751 = vmatpush1.msra.mxu0 0.0
  %1752 = vmatprep.subr.mxu0 0.0
  %1753 = vmatpush1.msra.mxu0 0.0
  %1754 = vmatprep.mubr.f32.mxu0 0.0
  %1755 = vmatmul.mubr.f32.gmra.mrb[0].mxu0 %v1688
  %v1756 = vpop.f32.mrb[0].mxu0
  %v1757 = vadd.f32 %v305, %v1756
  %v1758 = vpop.f32.mrb[0].mxu0
  %1759 = vdwg.mxu0
  %v1760 = vmul.f32 %v1757, %v199
  %v1761 = vtanh.pop %v1760
  %v1762 = vmul.f32 %v1761, 0.5
  %v1763 = vadd.f32 %v1762, 0.5
  %v1764 = vmul.f32 %v1763, %v1577
  %1766 = vrot.lane.b32.xlu0 %v1761, 64
  %v1767 = vpop.permute.xlu0 %1766
  %v1769 = vmul.f32 %v1763, %v1767
  %1771 = vrot.lane.b32.xlu0 %v1769, 32
  %v1772 = vpop.permute.xlu0 %1771
  %v1774 = vadd.f32 %v1764, %v1772
  %v1775 = vtanh.pop %v1774
  %1777 = vrot.lane.b32.xlu0 %v1775, 64
  %v1778 = vpop.permute.xlu0 %1777
  %v1780 = vmul.f32 %v1763, %v1778
  %v1781 = vld [vmem:[%s6] sm:$0x1]
  %v1783 = vlaneseq
  %v1784 = vshrl.u32 %v1783, 7
  %v1785 = vsub.s32 0, %v1784
  %v1786 = vrot.slane %v1781, %v1785
  %1787 = vrot.lane.b32.xlu0 %v1786, 96
  %v1788 = vpop.permute.xlu0 %1787
  %v1790 = vmul.f32 %v1780, %v1788
  %1792 = vrot.lane.b32.xlu0 %v1790, 32
  %v1793 = vpop.permute.xlu0 %1792
  %v1795 = vsel %vm200, %v1793, 0.0
  %1796 = vadd.xlane.f32.xlu0 %v1795
  %v1797 = vpop.xlane.xlu0 %1796
  %v1798 = vld [vmem:[#allocation2] sm:$0x1]
  %v1800 = vlaneseq
  %v1801 = vshrl.u32 %v1800, 7
  %v1802 = vsub.s32 0, %v1801
  %v1803 = vrot.slane %v1798, %v1802
  %v1805 = vadd.f32 %v1797, %v1803
  %vm1806 = vcmask 7168
  %1807 = vst.msk [vmem:[%s8] sm:$0xff] %vm1806, %v1805
  // Predicated region
  $region34: #{lstm_regressor_forward.1} parent=0 // pred_check
    _
  $region35: #{lstm_regressor_forward.1} parent=0 // pred_check_branch
    %1809 = sbr.rel (0) target = $region37
  $region36: #{lstm_regressor_forward.1} parent=0 // pred_region
    _
  $region37: #{lstm_regressor_forward.1} parent=0 // pred_fallthru
    _
  // Predicated region
  $region38: #{lstm_regressor_forward.1} parent=0 // pred_check
    _
  $region39: #{lstm_regressor_forward.1} parent=0 // pred_check_branch
    %1811 = sbr.rel (0) target = $region41
  $region40: #{lstm_regressor_forward.1} parent=0 // pred_region
    _
  $region41: #{lstm_regressor_forward.1} parent=0 // pred_fallthru
    _

</llo_original>
